<compile_context>
chip_gen: v7x
topology: tpu7x:2x2x1
jax: 0.10.0
libtpu: 0.0.40
codegen_flags: <defaults>
</compile_context>

<pallas_src>
import functools

import jax
import jax.numpy as jnp
from jax.experimental import pallas as pl
from jax.experimental.pallas import tpu as pltpu


_CONV_CFG = ((8, 4, 32), (4, 2, 64), (3, 1, 96))   # (kernel, stride, Cout)
_NEG_SLOPE = 0.01                                  # F.leaky_relu default
_COMPUTE_DTYPE = jnp.bfloat16


def _round_up(x, m):
    return (x + m - 1) // m * m


def _conv_size_out(s, k, stride):
    return (s - (k - 1) - 1) // stride + 1


def _m_tile(m, max_tile=1024):
    """Row-tile size: multiples of 16 (bf16 sublane tile); >=2 grid steps when
    M is large enough to matter (v7x has 2 TensorCores); capped at 1024."""
    m16 = _round_up(m, 16)
    if m16 <= 64:
        return m16
    return min(_round_up(pl.cdiv(m16, 2), 16), max_tile)


def _leaky(y):
    return jnp.maximum(y, _NEG_SLOPE * y)


# ---------------------------------------------------------------------------
# Pallas kernels
# ---------------------------------------------------------------------------
def _conv_mm_kernel(x_ref, w_ref, b_ref, o_ref):
    """o = leaky_relu(x @ w + b); bf16 operands, f32 MXU accumulation."""
    acc = jnp.dot(x_ref[...], w_ref[...], preferred_element_type=jnp.float32)
    o_ref[...] = _leaky(acc + b_ref[...]).astype(o_ref.dtype)


def _fused_head_kernel(x_ref, wc_ref, bc_ref, w1_ref, b1_ref,
                       w2_ref, b2_ref, w3_ref, b3_ref, o_ref):
    """conv3(+bn3) -> fc1 -> fc2 -> fc3 in one kernel; weights VMEM-resident."""
    def mm(a, w_ref_, b_ref_):
        return jnp.dot(a, w_ref_[...],
                       preferred_element_type=jnp.float32) + b_ref_[...]

    h = _leaky(mm(x_ref[...], wc_ref, bc_ref)).astype(_COMPUTE_DTYPE)   # conv3+bn3
    h = _leaky(mm(h, w1_ref, b1_ref)).astype(_COMPUTE_DTYPE)            # fc1
    h = _leaky(mm(h, w2_ref, b2_ref)).astype(_COMPUTE_DTYPE)            # fc2
    o_ref[...] = mm(h, w3_ref, b3_ref).astype(o_ref.dtype)              # fc3


# ---------------------------------------------------------------------------
# pallas_call wrappers
# ---------------------------------------------------------------------------
def pallas_conv_layer(patches, w, b, out_dtype=_COMPUTE_DTYPE):
    """leaky((patches @ w) + b): patches (M,K) bf16, w (K,128) bf16, b (1,128)."""
    M, K = patches.shape
    Kw, N = w.shape
    assert K == Kw, (K, Kw)
    tm = _m_tile(M)
    grid = (pl.cdiv(M, tm),)
    return pl.pallas_call(
        _conv_mm_kernel,
        out_shape=jax.ShapeDtypeStruct((M, N), out_dtype),
        grid_spec=pltpu.PrefetchScalarGridSpec(
            num_scalar_prefetch=0,
            grid=grid,
            in_specs=[
                pl.BlockSpec((tm, K), lambda i: (i, 0)),   # activations: tile M
                pl.BlockSpec((K, N), lambda i: (0, 0)),    # weights: resident
                pl.BlockSpec((1, N), lambda i: (0, 0)),    # fused bias
            ],
            out_specs=pl.BlockSpec((tm, N), lambda i: (i, 0)),
        ),
        compiler_params=pltpu.CompilerParams(
            dimension_semantics=("parallel",)),
    )(patches, w, b)


def pallas_fused_head(x, wc, bc, w1, b1, w2, b2, w3, b3):
    """Fused conv3 -> fc1 -> fc2 -> fc3 in one pallas_call."""
    M, K = x.shape
    N = w3.shape[1]
    tm = _m_tile(M)
    grid = (pl.cdiv(M, tm),)

    def resident(shape):
        return pl.BlockSpec(shape, lambda i: (0, 0))

    return pl.pallas_call(
        _fused_head_kernel,
        out_shape=jax.ShapeDtypeStruct((M, N), jnp.float32),
        grid_spec=pltpu.PrefetchScalarGridSpec(
            num_scalar_prefetch=0,
            grid=grid,
            in_specs=[
                pl.BlockSpec((tm, K), lambda i: (i, 0)),
                resident(wc.shape), resident(bc.shape),
                resident(w1.shape), resident(b1.shape),
                resident(w2.shape), resident(b2.shape),
                resident(w3.shape), resident(b3.shape),
            ],
            out_specs=pl.BlockSpec((tm, N), lambda i: (i, 0)),
        ),
        compiler_params=pltpu.CompilerParams(
            dimension_semantics=("parallel",)),
    )(x, wc, bc, w1, b1, w2, b2, w3, b3)


# ---------------------------------------------------------------------------
# Glue: im2col, one-time parameter prep, forward pass.
# ---------------------------------------------------------------------------
def _im2col(x_nhwc, kh, kw, stride):
    B, H, W, C = x_nhwc.shape
    OH = (H - kh) // stride + 1
    OW = (W - kw) // stride + 1
    cols = []
    for i in range(kh):
        for j in range(kw):
            cols.append(x_nhwc[:, i:i + stride * OH:stride,
                               j:j + stride * OW:stride, :])
    patches = jnp.stack(cols, axis=3)                  # (B, OH, OW, kh*kw, C)
    patches = patches.reshape(B * OH * OW, kh * kw * C)
    return patches, OH, OW


def _fold_conv_bn(conv, bn, eps):
    """Fold eval-mode BN into conv; pad Cout -> multiple of 128 (lane-dense)."""
    w = conv["w"].astype(jnp.float32)                  # (Cout, Cin, kh, kw)
    cout, cin, kh, kw = w.shape
    # im2col layout: row index = (i*kw + j)*Cin + cin (channel fastest).
    wmat = jnp.transpose(w, (2, 3, 1, 0)).reshape(kh * kw * cin, cout)
    s = bn["gamma"] / jnp.sqrt(bn["var"] + eps)
    bias = (conv["b"] - bn["mean"]) * s + bn["beta"]
    n_pad = _round_up(cout, 128)
    wmat = jnp.pad(wmat * s[None, :], ((0, 0), (0, n_pad - cout)))
    bias = jnp.pad(bias.reshape(1, cout), ((0, 0), (0, n_pad - cout)))
    return wmat.astype(_COMPUTE_DTYPE), bias.astype(jnp.float32)


def _fc_padded(p, k_pad, n_pad):
    """Transpose fc weight to (K,N) and zero-pad to (k_pad, n_pad)."""
    wt = p["w"].astype(jnp.float32).T                  # (K, N)
    K, N = wt.shape
    assert K <= k_pad and N <= n_pad, (K, N, k_pad, n_pad)
    w = jnp.pad(wt, ((0, k_pad - K), (0, n_pad - N)))
    b = jnp.pad(p["b"].astype(jnp.float32).reshape(1, N),
                ((0, 0), (0, n_pad - N)))
    return w.astype(_COMPUTE_DTYPE), b


def prepare_params(params, h, w, eps=1e-5):
    """One-time, offline weight prep (never re-run per forward)."""
    # Verify conv3 covers the whole remaining spatial extent (1x1 output);
    # that is what lets conv3 fuse with the FC head.
    ch = _conv_size_out(_conv_size_out(h, 8, 4), 4, 2)
    cw = _conv_size_out(_conv_size_out(w, 8, 4), 4, 2)
    if ch != 3 or cw != 3:
        # TODO(synk): general (>1x1) conv3 spatial output would need a separate
        # conv3 kernel plus an NHWC-permuted fc1 weight; not implemented.
        raise NotImplementedError("fused head requires 1x1 conv3 output")

    prep = {"convs": [], "head": {}}
    for li in (1, 2):
        wmat, bias = _fold_conv_bn(params[f"conv{li}"], params[f"bn{li}"], eps)
        prep["convs"].append({"w": wmat, "b": bias})

    wc, bc = _fold_conv_bn(params["conv3"], params["bn3"], eps)   # (576,128)
    # conv3 output channels are padded 96 -> 128 with exact zeros, so fc1's
    # padded (zero) rows keep the result exact.  With 1x1 spatial, NCHW flatten
    # order == channel order, so no fc1 row permutation is needed.
    w1, b1 = _fc_padded(params["fc1"], 128, 128)
    w2, b2 = _fc_padded(params["fc2"], 128, 128)
    w3, b3 = _fc_padded(params["fc3"], 128, 128)
    prep["head"] = {"wc": wc, "bc": bc, "w1": w1, "b1": b1,
                    "w2": w2, "b2": b2, "w3": w3, "b3": b3}
    return prep


def _jnp_matmul_bias_act(x, w, b, neg_slope):
    y = jnp.dot(x, w, preferred_element_type=jnp.float32) + b
    if neg_slope is not None:
        y = jnp.maximum(y, neg_slope * y)
    return y


def dqn_forward(prep, x_nchw, *, n_out, use_pallas=True):
    x = jnp.transpose(x_nchw.astype(jnp.float32), (0, 2, 3, 1))  # NCHW -> NHWC
    x = x.astype(_COMPUTE_DTYPE)
    B = x.shape[0]

    # conv1 / conv2: im2col glue + one matmul kernel each (lane-dense N=128).
    for (ksize, stride, cout), layer in zip(_CONV_CFG[:2], prep["convs"]):
        patches, OH, OW = _im2col(x, ksize, ksize, stride)
        if use_pallas:
            y = pallas_conv_layer(patches, layer["w"], layer["b"])
        else:
            y = _jnp_matmul_bias_act(patches, layer["w"], layer["b"],
                                     _NEG_SLOPE).astype(_COMPUTE_DTYPE)
        x = y.reshape(B, OH, OW, -1)[..., :cout]       # drop lane padding

    # conv3 output is 1x1 spatial, so its im2col == the NHWC flatten of x,
    # in (kh, kw, Cin) channel-fastest order -- exactly the prepared W layout.
    kh3 = _CONV_CFG[2][0]
    assert x.shape[1] == kh3 and x.shape[2] == kh3, x.shape
    patches3 = x.reshape(B, kh3 * kh3 * x.shape[3])    # (B, 576)

    hd = prep["head"]
    if use_pallas:
        out = pallas_fused_head(patches3, hd["wc"], hd["bc"], hd["w1"], hd["b1"],
                                hd["w2"], hd["b2"], hd["w3"], hd["b3"])
    else:
        h = _jnp_matmul_bias_act(patches3, hd["wc"], hd["bc"],
                                 _NEG_SLOPE).astype(_COMPUTE_DTYPE)
        h = _jnp_matmul_bias_act(h, hd["w1"], hd["b1"],
                                 _NEG_SLOPE).astype(_COMPUTE_DTYPE)
        h = _jnp_matmul_bias_act(h, hd["w2"], hd["b2"],
                                 _NEG_SLOPE).astype(_COMPUTE_DTYPE)
        out = _jnp_matmul_bias_act(h, hd["w3"], hd["b3"], None)

    # fc3's padded weight columns / bias entries are zero, so slicing is exact.
    return out[:, :n_out].astype(jnp.float32)


def dqn_forward_f32(params, x_nchw, eps=1e-5):
    """Pure-JAX f32 reference with the original (unprepared) parameters."""
    x = jnp.transpose(x_nchw.astype(jnp.float32), (0, 2, 3, 1))
    B = x.shape[0]
    for li, (k, stride, cout) in enumerate(_CONV_CFG, start=1):
        conv, bn = params[f"conv{li}"], params[f"bn{li}"]
        w = conv["w"].astype(jnp.float32)
        _, cin, kh, kw = w.shape
        wmat = jnp.transpose(w, (2, 3, 1, 0)).reshape(kh * kw * cin, cout)
        patches, OH, OW = _im2col(x, kh, kw, stride)
        y = jnp.dot(patches, wmat,
                    precision=jax.lax.Precision.HIGHEST) + conv["b"]
        y = (y - bn["mean"]) * (bn["gamma"] / jnp.sqrt(bn["var"] + eps)) + bn["beta"]
        y = jnp.where(y >= 0, y, _NEG_SLOPE * y)
        x = y.reshape(B, OH, OW, cout)
    x = jnp.transpose(x, (0, 3, 1, 2)).reshape(B, -1)   # torch NCHW flatten
    for name, slope in (("fc1", _NEG_SLOPE), ("fc2", _NEG_SLOPE), ("fc3", None)):
        p = params[name]
        x = jnp.dot(x, p["w"].T, precision=jax.lax.Precision.HIGHEST) + p["b"]
        if slope is not None:
            x = jnp.where(x >= 0, x, slope * x)
    return x.astype(jnp.float32)


def init_params(key, h, w, n_out):
    convw = _conv_size_out(_conv_size_out(_conv_size_out(w, 8, 4), 4, 2), 3, 1)
    convh = _conv_size_out(_conv_size_out(_conv_size_out(h, 8, 4), 4, 2), 3, 1)
    lin = convw * convh * 96
    fc1_out = (lin + n_out) // 3
    fc2_out = (lin + n_out) // 3

    keys = iter(jax.random.split(key, 32))
    params = {}

    def conv_p(cout, cin, k):
        return {
            "w": 0.08 * jax.random.normal(next(keys), (cout, cin, k, k), jnp.float32),
            "b": 0.05 * jax.random.normal(next(keys), (cout,), jnp.float32),
        }

    def bn_p(c):
        return {
            "gamma": 1.0 + 0.2 * jax.random.normal(next(keys), (c,), jnp.float32),
            "beta": 0.1 * jax.random.normal(next(keys), (c,), jnp.float32),
            "mean": 0.1 * jax.random.normal(next(keys), (c,), jnp.float32),
            "var": 0.8 + 0.4 * jax.random.uniform(next(keys), (c,), jnp.float32),
        }

    def fc_p(cout, cin):
        return {
            "w": 0.08 * jax.random.normal(next(keys), (cout, cin), jnp.float32),
            "b": 0.05 * jax.random.normal(next(keys), (cout,), jnp.float32),
        }

    params["conv1"], params["bn1"] = conv_p(32, 4, 8), bn_p(32)
    params["conv2"], params["bn2"] = conv_p(64, 32, 4), bn_p(64)
    params["conv3"], params["bn3"] = conv_p(96, 64, 3), bn_p(96)
    params["fc1"] = fc_p(fc1_out, lin)
    params["fc2"] = fc_p(fc2_out, fc1_out)
    params["fc3"] = fc_p(n_out, fc2_out)
    return params


if __name__ == "__main__":
    key = jax.random.PRNGKey(0)
    kx, kp = jax.random.split(key)

    # Small but conv-valid shapes: 40x40 -> 9x9 -> 3x3 -> 1x1 spatial.
    B, C, H, W = 2, 4, 40, 40
    N_ACTIONS = 3

    x = jax.random.normal(kx, (B, C, H, W), jnp.float32)
    params = init_params(kp, H, W, N_ACTIONS)

    # One-time weight prep (fold BN, flatten/pad/transpose, bf16 cast).
    prep = jax.block_until_ready(prepare_params(params, H, W))

    forward_pallas = jax.jit(
        functools.partial(dqn_forward, n_out=N_ACTIONS, use_pallas=True))
    forward_jnp = jax.jit(
        functools.partial(dqn_forward, n_out=N_ACTIONS, use_pallas=False))
    forward_f32 = jax.jit(dqn_forward_f32)

    out = jax.block_until_ready(forward_pallas(prep, x))
    ref_bf16 = jax.block_until_ready(forward_jnp(prep, x))   # same precision, no Pallas
    ref_f32 = jax.block_until_ready(forward_f32(params, x))  # original f32 semantics

    assert out.shape == (B, N_ACTIONS), out.shape
    assert out.dtype == jnp.float32
    assert bool(jnp.all(jnp.isfinite(out)))
    # Pallas kernels vs identical-precision JAX reference (tight).
    assert bool(jnp.allclose(out, ref_bf16, rtol=2e-2, atol=2e-2)), (out, ref_bf16)
    # Sanity check against original f32 eval-mode semantics (loose: bf16 compute).
    assert bool(jnp.allclose(out, ref_f32, rtol=1e-1, atol=1.5e-1)), (out, ref_f32)

    print("KERNEL_OK")
</pallas_src>

<mosaic_0001>
module attributes {stable_mosaic.version = 11 : i64} {
  func.func @_conv_mm_kernel(%arg0: i32, %arg1: memref<96x256xbf16, #tpu.memory_space<vmem>>, %arg2: memref<256x128xbf16, #tpu.memory_space<vmem>>, %arg3: memref<1x128xf32, #tpu.memory_space<vmem>>, %arg4: memref<96x128xbf16, #tpu.memory_space<vmem>>) attributes {dimension_semantics = [#tpu.dimension_semantics<parallel>], iteration_bounds = array<i64: 2>, scalar_prefetch = 0 : i64, scratch_operands = 0 : i64, tpu.core_type = #tpu.core_type<tc>, window_params = [{transform_indices = @transform_0, window_bounds = array<i64: 96, 256>}, {pipeline_mode = #tpu.pipeline_mode<synchronous>, transform_indices = @transform_1, window_bounds = array<i64: 256, 128>}, {pipeline_mode = #tpu.pipeline_mode<synchronous>, transform_indices = @transform_2, window_bounds = array<i64: 1, 128>}, {transform_indices = @transform_3, window_bounds = array<i64: 96, 128>}]} {
    %c0 = arith.constant 0 : index
    %c0_0 = arith.constant 0 : index
    %0 = vector.load %arg1[%c0, %c0_0] : memref<96x256xbf16, #tpu.memory_space<vmem>>, vector<96x256xbf16>
    %c0_1 = arith.constant 0 : index
    %c0_2 = arith.constant 0 : index
    %1 = vector.load %arg2[%c0_1, %c0_2] : memref<256x128xbf16, #tpu.memory_space<vmem>>, vector<256x128xbf16>
    %cst = arith.constant dense<0.000000e+00> : vector<96x128xf32>
    %2 = tpu.matmul %0, %1, %cst {dimension_numbers = #tpu.dot_dimension_numbers<[1], [0], [0], [1], [0, 0, 1, 1], [], []>} : vector<96x256xbf16>, vector<256x128xbf16>, vector<96x128xf32> -> vector<96x128xf32>
    %c0_3 = arith.constant 0 : index
    %c0_4 = arith.constant 0 : index
    %3 = vector.load %arg3[%c0_3, %c0_4] : memref<1x128xf32, #tpu.memory_space<vmem>>, vector<1x128xf32>
    %4 = vector.broadcast %3 : vector<1x128xf32> to vector<96x128xf32>
    %5 = arith.addf %2, %4 : vector<96x128xf32>
    %cst_5 = arith.constant 0.00999999977 : f32
    %6 = vector.broadcast %cst_5 : f32 to vector<96x128xf32>
    %7 = arith.mulf %6, %5 : vector<96x128xf32>
    %8 = arith.maximumf %5, %7 : vector<96x128xf32>
    %9 = arith.truncf %8 : vector<96x128xf32> to vector<96x128xbf16>
    %c0_6 = arith.constant 0 : index
    %c0_7 = arith.constant 0 : index
    %10 = vector.load %arg4[%c0_6, %c0_7] : memref<96x128xbf16, #tpu.memory_space<vmem>>, vector<96x128xbf16>
    tpu.vector_store %arg4[%c0_6, %c0_7], %9 {strides = array<i32>} : memref<96x128xbf16, #tpu.memory_space<vmem>>, vector<96x128xbf16>,
    return
  }
  func.func @transform_0(%arg0: i32) -> (i32, i32) {
    %c0_i32 = arith.constant 0 : i32
    %c0_i32_0 = arith.constant 0 : i32
    return %arg0, %c0_i32 : i32, i32
  }
  func.func @transform_1(%arg0: i32) -> (i32, i32) {
    %c0_i32 = arith.constant 0 : i32
    %c0_i32_0 = arith.constant 0 : i32
    %c0_i32_1 = arith.constant 0 : i32
    return %c0_i32, %c0_i32_0 : i32, i32
  }
  func.func @transform_2(%arg0: i32) -> (i32, i32) {
    %c0_i32 = arith.constant 0 : i32
    %c0_i32_0 = arith.constant 0 : i32
    %c0_i32_1 = arith.constant 0 : i32
    return %c0_i32, %c0_i32_0 : i32, i32
  }
  func.func @transform_3(%arg0: i32) -> (i32, i32) {
    %c0_i32 = arith.constant 0 : i32
    %c0_i32_0 = arith.constant 0 : i32
    return %arg0, %c0_i32 : i32, i32
  }
}

module attributes {stable_mosaic.version = 11 : i64} {
  func.func @_conv_mm_kernel(%arg0: i32, %arg1: memref<32x512xbf16, #tpu.memory_space<vmem>>, %arg2: memref<512x128xbf16, #tpu.memory_space<vmem>>, %arg3: memref<1x128xf32, #tpu.memory_space<vmem>>, %arg4: memref<32x128xbf16, #tpu.memory_space<vmem>>) attributes {dimension_semantics = [#tpu.dimension_semantics<parallel>], iteration_bounds = array<i64: 1>, scalar_prefetch = 0 : i64, scratch_operands = 0 : i64, tpu.core_type = #tpu.core_type<tc>, window_params = [{transform_indices = @transform_0, window_bounds = array<i64: 32, 512>}, {pipeline_mode = #tpu.pipeline_mode<synchronous>, transform_indices = @transform_1, window_bounds = array<i64: 512, 128>}, {pipeline_mode = #tpu.pipeline_mode<synchronous>, transform_indices = @transform_2, window_bounds = array<i64: 1, 128>}, {transform_indices = @transform_3, window_bounds = array<i64: 32, 128>}]} {
    %c0 = arith.constant 0 : index
    %c0_0 = arith.constant 0 : index
    %0 = vector.load %arg1[%c0, %c0_0] : memref<32x512xbf16, #tpu.memory_space<vmem>>, vector<32x512xbf16>
    %c0_1 = arith.constant 0 : index
    %c0_2 = arith.constant 0 : index
    %1 = vector.load %arg2[%c0_1, %c0_2] : memref<512x128xbf16, #tpu.memory_space<vmem>>, vector<512x128xbf16>
    %cst = arith.constant dense<0.000000e+00> : vector<32x128xf32>
    %2 = tpu.matmul %0, %1, %cst {dimension_numbers = #tpu.dot_dimension_numbers<[1], [0], [0], [1], [0, 0, 1, 1], [], []>} : vector<32x512xbf16>, vector<512x128xbf16>, vector<32x128xf32> -> vector<32x128xf32>
    %c0_3 = arith.constant 0 : index
    %c0_4 = arith.constant 0 : index
    %3 = vector.load %arg3[%c0_3, %c0_4] : memref<1x128xf32, #tpu.memory_space<vmem>>, vector<1x128xf32>
    %4 = vector.broadcast %3 : vector<1x128xf32> to vector<32x128xf32>
    %5 = arith.addf %2, %4 : vector<32x128xf32>
    %cst_5 = arith.constant 0.00999999977 : f32
    %6 = vector.broadcast %cst_5 : f32 to vector<32x128xf32>
    %7 = arith.mulf %6, %5 : vector<32x128xf32>
    %8 = arith.maximumf %5, %7 : vector<32x128xf32>
    %9 = arith.truncf %8 : vector<32x128xf32> to vector<32x128xbf16>
    %c0_6 = arith.constant 0 : index
    %c0_7 = arith.constant 0 : index
    %10 = vector.load %arg4[%c0_6, %c0_7] : memref<32x128xbf16, #tpu.memory_space<vmem>>, vector<32x128xbf16>
    tpu.vector_store %arg4[%c0_6, %c0_7], %9 {strides = array<i32>} : memref<32x128xbf16, #tpu.memory_space<vmem>>, vector<32x128xbf16>,
    return
  }
  func.func @transform_0(%arg0: i32) -> (i32, i32) {
    %c0_i32 = arith.constant 0 : i32
    %c0_i32_0 = arith.constant 0 : i32
    return %arg0, %c0_i32 : i32, i32
  }
  func.func @transform_1(%arg0: i32) -> (i32, i32) {
    %c0_i32 = arith.constant 0 : i32
    %c0_i32_0 = arith.constant 0 : i32
    %c0_i32_1 = arith.constant 0 : i32
    return %c0_i32, %c0_i32_0 : i32, i32
  }
  func.func @transform_2(%arg0: i32) -> (i32, i32) {
    %c0_i32 = arith.constant 0 : i32
    %c0_i32_0 = arith.constant 0 : i32
    %c0_i32_1 = arith.constant 0 : i32
    return %c0_i32, %c0_i32_0 : i32, i32
  }
  func.func @transform_3(%arg0: i32) -> (i32, i32) {
    %c0_i32 = arith.constant 0 : i32
    %c0_i32_0 = arith.constant 0 : i32
    return %arg0, %c0_i32 : i32, i32
  }
}

module attributes {stable_mosaic.version = 11 : i64} {
  func.func @_fused_head_kernel(%arg0: i32, %arg1: memref<16x576xbf16, #tpu.memory_space<vmem>>, %arg2: memref<576x128xbf16, #tpu.memory_space<vmem>>, %arg3: memref<1x128xf32, #tpu.memory_space<vmem>>, %arg4: memref<128x128xbf16, #tpu.memory_space<vmem>>, %arg5: memref<1x128xf32, #tpu.memory_space<vmem>>, %arg6: memref<128x128xbf16, #tpu.memory_space<vmem>>, %arg7: memref<1x128xf32, #tpu.memory_space<vmem>>, %arg8: memref<128x128xbf16, #tpu.memory_space<vmem>>, %arg9: memref<1x128xf32, #tpu.memory_space<vmem>>, %arg10: memref<16x128xf32, #tpu.memory_space<vmem>>) attributes {dimension_semantics = [#tpu.dimension_semantics<parallel>], iteration_bounds = array<i64: 1>, scalar_prefetch = 0 : i64, scratch_operands = 0 : i64, tpu.core_type = #tpu.core_type<tc>, window_params = [{transform_indices = @transform_0, window_bounds = array<i64: 16, 576>}, {pipeline_mode = #tpu.pipeline_mode<synchronous>, transform_indices = @transform_1, window_bounds = array<i64: 576, 128>}, {pipeline_mode = #tpu.pipeline_mode<synchronous>, transform_indices = @transform_2, window_bounds = array<i64: 1, 128>}, {pipeline_mode = #tpu.pipeline_mode<synchronous>, transform_indices = @transform_3, window_bounds = array<i64: 128, 128>}, {pipeline_mode = #tpu.pipeline_mode<synchronous>, transform_indices = @transform_4, window_bounds = array<i64: 1, 128>}, {pipeline_mode = #tpu.pipeline_mode<synchronous>, transform_indices = @transform_5, window_bounds = array<i64: 128, 128>}, {pipeline_mode = #tpu.pipeline_mode<synchronous>, transform_indices = @transform_6, window_bounds = array<i64: 1, 128>}, {pipeline_mode = #tpu.pipeline_mode<synchronous>, transform_indices = @transform_7, window_bounds = array<i64: 128, 128>}, {pipeline_mode = #tpu.pipeline_mode<synchronous>, transform_indices = @transform_8, window_bounds = array<i64: 1, 128>}, {transform_indices = @transform_9, window_bounds = array<i64: 16, 128>}]} {
    %c0 = arith.constant 0 : index
    %c0_0 = arith.constant 0 : index
    %0 = vector.load %arg1[%c0, %c0_0] : memref<16x576xbf16, #tpu.memory_space<vmem>>, vector<16x576xbf16>
    %c0_1 = arith.constant 0 : index
    %c0_2 = arith.constant 0 : index
    %1 = vector.load %arg2[%c0_1, %c0_2] : memref<576x128xbf16, #tpu.memory_space<vmem>>, vector<576x128xbf16>
    %cst = arith.constant dense<0.000000e+00> : vector<16x128xf32>
    %2 = tpu.matmul %0, %1, %cst {dimension_numbers = #tpu.dot_dimension_numbers<[1], [0], [0], [1], [0, 0, 1, 1], [], []>} : vector<16x576xbf16>, vector<576x128xbf16>, vector<16x128xf32> -> vector<16x128xf32>
    %c0_3 = arith.constant 0 : index
    %c0_4 = arith.constant 0 : index
    %3 = vector.load %arg3[%c0_3, %c0_4] : memref<1x128xf32, #tpu.memory_space<vmem>>, vector<1x128xf32>
    %4 = vector.broadcast %3 : vector<1x128xf32> to vector<16x128xf32>
    %5 = arith.addf %2, %4 : vector<16x128xf32>
    %cst_5 = arith.constant 0.00999999977 : f32
    %6 = vector.broadcast %cst_5 : f32 to vector<16x128xf32>
    %7 = arith.mulf %6, %5 : vector<16x128xf32>
    %8 = arith.maximumf %5, %7 : vector<16x128xf32>
    %9 = arith.truncf %8 : vector<16x128xf32> to vector<16x128xbf16>
    %c0_6 = arith.constant 0 : index
    %c0_7 = arith.constant 0 : index
    %10 = vector.load %arg4[%c0_6, %c0_7] : memref<128x128xbf16, #tpu.memory_space<vmem>>, vector<128x128xbf16>
    %cst_8 = arith.constant dense<0.000000e+00> : vector<16x128xf32>
    %11 = tpu.matmul %9, %10, %cst_8 {dimension_numbers = #tpu.dot_dimension_numbers<[1], [0], [0], [1], [0, 0, 1, 1], [], []>} : vector<16x128xbf16>, vector<128x128xbf16>, vector<16x128xf32> -> vector<16x128xf32>
    %c0_9 = arith.constant 0 : index
    %c0_10 = arith.constant 0 : index
    %12 = vector.load %arg5[%c0_9, %c0_10] : memref<1x128xf32, #tpu.memory_space<vmem>>, vector<1x128xf32>
    %13 = vector.broadcast %12 : vector<1x128xf32> to vector<16x128xf32>
    %14 = arith.addf %11, %13 : vector<16x128xf32>
    %cst_11 = arith.constant 0.00999999977 : f32
    %15 = vector.broadcast %cst_11 : f32 to vector<16x128xf32>
    %16 = arith.mulf %15, %14 : vector<16x128xf32>
    %17 = arith.maximumf %14, %16 : vector<16x128xf32>
    %18 = arith.truncf %17 : vector<16x128xf32> to vector<16x128xbf16>
    %c0_12 = arith.constant 0 : index
    %c0_13 = arith.constant 0 : index
    %19 = vector.load %arg6[%c0_12, %c0_13] : memref<128x128xbf16, #tpu.memory_space<vmem>>, vector<128x128xbf16>
    %cst_14 = arith.constant dense<0.000000e+00> : vector<16x128xf32>
    %20 = tpu.matmul %18, %19, %cst_14 {dimension_numbers = #tpu.dot_dimension_numbers<[1], [0], [0], [1], [0, 0, 1, 1], [], []>} : vector<16x128xbf16>, vector<128x128xbf16>, vector<16x128xf32> -> vector<16x128xf32>
    %c0_15 = arith.constant 0 : index
    %c0_16 = arith.constant 0 : index
    %21 = vector.load %arg7[%c0_15, %c0_16] : memref<1x128xf32, #tpu.memory_space<vmem>>, vector<1x128xf32>
    %22 = vector.broadcast %21 : vector<1x128xf32> to vector<16x128xf32>
    %23 = arith.addf %20, %22 : vector<16x128xf32>
    %cst_17 = arith.constant 0.00999999977 : f32
    %24 = vector.broadcast %cst_17 : f32 to vector<16x128xf32>
    %25 = arith.mulf %24, %23 : vector<16x128xf32>
    %26 = arith.maximumf %23, %25 : vector<16x128xf32>
    %27 = arith.truncf %26 : vector<16x128xf32> to vector<16x128xbf16>
    %c0_18 = arith.constant 0 : index
    %c0_19 = arith.constant 0 : index
    %28 = vector.load %arg8[%c0_18, %c0_19] : memref<128x128xbf16, #tpu.memory_space<vmem>>, vector<128x128xbf16>
    %cst_20 = arith.constant dense<0.000000e+00> : vector<16x128xf32>
    %29 = tpu.matmul %27, %28, %cst_20 {dimension_numbers = #tpu.dot_dimension_numbers<[1], [0], [0], [1], [0, 0, 1, 1], [], []>} : vector<16x128xbf16>, vector<128x128xbf16>, vector<16x128xf32> -> vector<16x128xf32>
    %c0_21 = arith.constant 0 : index
    %c0_22 = arith.constant 0 : index
    %30 = vector.load %arg9[%c0_21, %c0_22] : memref<1x128xf32, #tpu.memory_space<vmem>>, vector<1x128xf32>
    %31 = vector.broadcast %30 : vector<1x128xf32> to vector<16x128xf32>
    %32 = arith.addf %29, %31 : vector<16x128xf32>
    %c0_23 = arith.constant 0 : index
    %c0_24 = arith.constant 0 : index
    %33 = vector.load %arg10[%c0_23, %c0_24] : memref<16x128xf32, #tpu.memory_space<vmem>>, vector<16x128xf32>
    tpu.vector_store %arg10[%c0_23, %c0_24], %32 {strides = array<i32>} : memref<16x128xf32, #tpu.memory_space<vmem>>, vector<16x128xf32>,
    return
  }
  func.func @transform_0(%arg0: i32) -> (i32, i32) {
    %c0_i32 = arith.constant 0 : i32
    %c0_i32_0 = arith.constant 0 : i32
    return %arg0, %c0_i32 : i32, i32
  }
  func.func @transform_1(%arg0: i32) -> (i32, i32) {
    %c0_i32 = arith.constant 0 : i32
    %c0_i32_0 = arith.constant 0 : i32
    %c0_i32_1 = arith.constant 0 : i32
    return %c0_i32, %c0_i32_0 : i32, i32
  }
  func.func @transform_2(%arg0: i32) -> (i32, i32) {
    %c0_i32 = arith.constant 0 : i32
    %c0_i32_0 = arith.constant 0 : i32
    %c0_i32_1 = arith.constant 0 : i32
    return %c0_i32, %c0_i32_0 : i32, i32
  }
  func.func @transform_3(%arg0: i32) -> (i32, i32) {
    %c0_i32 = arith.constant 0 : i32
    %c0_i32_0 = arith.constant 0 : i32
    %c0_i32_1 = arith.constant 0 : i32
    return %c0_i32, %c0_i32_0 : i32, i32
  }
  func.func @transform_4(%arg0: i32) -> (i32, i32) {
    %c0_i32 = arith.constant 0 : i32
    %c0_i32_0 = arith.constant 0 : i32
    %c0_i32_1 = arith.constant 0 : i32
    return %c0_i32, %c0_i32_0 : i32, i32
  }
  func.func @transform_5(%arg0: i32) -> (i32, i32) {
    %c0_i32 = arith.constant 0 : i32
    %c0_i32_0 = arith.constant 0 : i32
    %c0_i32_1 = arith.constant 0 : i32
    return %c0_i32, %c0_i32_0 : i32, i32
  }
  func.func @transform_6(%arg0: i32) -> (i32, i32) {
    %c0_i32 = arith.constant 0 : i32
    %c0_i32_0 = arith.constant 0 : i32
    %c0_i32_1 = arith.constant 0 : i32
    return %c0_i32, %c0_i32_0 : i32, i32
  }
  func.func @transform_7(%arg0: i32) -> (i32, i32) {
    %c0_i32 = arith.constant 0 : i32
    %c0_i32_0 = arith.constant 0 : i32
    %c0_i32_1 = arith.constant 0 : i32
    return %c0_i32, %c0_i32_0 : i32, i32
  }
  func.func @transform_8(%arg0: i32) -> (i32, i32) {
    %c0_i32 = arith.constant 0 : i32
    %c0_i32_0 = arith.constant 0 : i32
    %c0_i32_1 = arith.constant 0 : i32
    return %c0_i32, %c0_i32_0 : i32, i32
  }
  func.func @transform_9(%arg0: i32) -> (i32, i32) {
    %c0_i32 = arith.constant 0 : i32
    %c0_i32_0 = arith.constant 0 : i32
    return %arg0, %c0_i32 : i32, i32
  }
}

</mosaic_0001>

<llo_original>
// kernel: dqn_forward.3
$region0: #{dqn_forward.3}
  #allocation0 [shape = 'u32[]', space=smem, size = 0x4, offset = 0x4, fixed_abs, tag = 'smem constant byte address 0x4 - core index']
  #allocation1 [shape = 'u32[144,128]{1,0:T(1,128)}', space=vmem, size = 0x12000, scoped, tag = 'internal scratch']
  %s0 = inlined_call_operand.vmem [shape: bf16[162,256], index: 0, kind: input, shape index: {}]
  %s1 = inlined_call_operand.vmem [shape: bf16[256,128], index: 1, kind: input, shape index: {}]
  %s2 = inlined_call_operand.vmem [shape: f32[1,128], index: 2, kind: input, shape index: {}]
  %s3 = inlined_call_operand.vmem [shape: bf16[162,128], index: 3, kind: output, shape index: {}]
  %s4 = sld [smem:[#allocation0]]
  $region89: #{dqn_forward.3} parent=0
    _
  %s6 = ssub.s32 1, %s4
  %s7 = scalar_select 0, %s6, %s4
  $region1: #{dqn_forward.3} parent=0
    #allocation2 [shape = 'u8[49152]{0}', space=vmem, size = 0xc000, scoped, tag = 'output window, operand 0']
    loop: start=0, step=1, limit=4
    $region2: #{dqn_forward.3} parent=1 // loop_pre_header
      _
    $region3: #{dqn_forward.3} parent=1 // loop_header
      %s9 = sphi 0, %s13
      %p10 = scmp.ge.s32.totalorder %s9, 4
      %s19 = sphi 0, %s21
      %s22 = sphi 0, %s19
      %s23 = sphi 0, %s22
      %s39 = sphi 0, %s23
      %s43 = sphi 0, %s43
      %s45 = sphi 0, %s43
      %s46 = sphi 0, %s45
      %s60 = sphi 0, %s46
      %s64 = sphi 0, %s64
      %s66 = sphi 0, %s64
      %s67 = sphi 0, %s66
      %s81 = sphi 0, %s67
      %s87 = sphi 0, %s89
      %s90 = sphi 0, %s87
      %s91 = sphi 0, %s90
      %s107 = sphi 0, %s91
    $region4: #{dqn_forward.3} parent=1 // loop_header_branch
      %12 = sbr.rel (%p10) target = $region8
    $region5: #{dqn_forward.3} parent=1 // loop_body
      %s14 = ssub.s32 %s9, 1
      %s15 = ssub.s32 %s9, 2
      %s16 = sadd.s32 %s9, 1
      %s17 = ssub.s32 %s9, %s16
      %p18 = scmp.eq.s32.totalorder %s17, 0
      %s20 = sadd.s32 %s19, 1
      %s21 = scalar_select %p18, %s19, %s20
      %p24 = pneg %p18
      %p25 = scmp.eq.s32.totalorder %s9, 1
      %p26 = por %p24, %p25
      %p27 = scmp.ne.s32.totalorder %s19, %s22
      %p28 = scmp.eq.s32.totalorder %s9, 0
      %p29 = por %p27, %p28
      %p30 = scmp.ne.s32.totalorder %s19, %s22
      %p31 = scmp.eq.s32.totalorder %s14, 1
      %p32 = por %p30, %p31
      %p33 = scmp.ne.s32.totalorder %s22, %s23
      %p34 = scmp.eq.s32.totalorder %s14, 0
      %p35 = por %p33, %p34
      %p36 = scmp.ne.s32.totalorder %s22, %s23
      %p37 = scmp.eq.s32.totalorder %s15, 1
      %p38 = por %p36, %p37
      %p40 = scmp.ne.s32.totalorder %s23, %s39
      %p41 = scmp.eq.s32.totalorder %s15, 0
      %p42 = por %p40, %p41
      %s44 = sadd.s32 %s43, 1
      %p47 = scmp.eq.s32.totalorder %s9, 1
      %p48 = scmp.ne.s32.totalorder %s43, %s45
      %p49 = scmp.eq.s32.totalorder %s9, 0
      %p50 = por %p48, %p49
      %p51 = scmp.ne.s32.totalorder %s43, %s45
      %p52 = scmp.eq.s32.totalorder %s14, 1
      %p53 = por %p51, %p52
      %p54 = scmp.ne.s32.totalorder %s45, %s46
      %p55 = scmp.eq.s32.totalorder %s14, 0
      %p56 = por %p54, %p55
      %p57 = scmp.ne.s32.totalorder %s45, %s46
      %p58 = scmp.eq.s32.totalorder %s15, 1
      %p59 = por %p57, %p58
      %p61 = scmp.ne.s32.totalorder %s46, %s60
      %p62 = scmp.eq.s32.totalorder %s15, 0
      %p63 = por %p61, %p62
      %s65 = sadd.s32 %s64, 1
      %p68 = scmp.eq.s32.totalorder %s9, 1
      %p69 = scmp.ne.s32.totalorder %s64, %s66
      %p70 = scmp.eq.s32.totalorder %s9, 0
      %p71 = por %p69, %p70
      %p72 = scmp.ne.s32.totalorder %s64, %s66
      %p73 = scmp.eq.s32.totalorder %s14, 1
      %p74 = por %p72, %p73
      %p75 = scmp.ne.s32.totalorder %s66, %s67
      %p76 = scmp.eq.s32.totalorder %s14, 0
      %p77 = por %p75, %p76
      %p78 = scmp.ne.s32.totalorder %s66, %s67
      %p79 = scmp.eq.s32.totalorder %s15, 1
      %p80 = por %p78, %p79
      %p82 = scmp.ne.s32.totalorder %s67, %s81
      %p83 = scmp.eq.s32.totalorder %s15, 0
      %p84 = por %p82, %p83
      %s85 = ssub.s32 %s9, %s16
      %p86 = scmp.eq.s32.totalorder %s85, 0
      %s88 = sadd.s32 %s87, 1
      %s89 = scalar_select %p86, %s87, %s88
      %p92 = pneg %p86
      %p93 = scmp.eq.s32.totalorder %s9, 1
      %p94 = por %p92, %p93
      %p95 = scmp.ne.s32.totalorder %s87, %s90
      %p96 = scmp.eq.s32.totalorder %s9, 0
      %p97 = por %p95, %p96
      %p98 = scmp.ne.s32.totalorder %s87, %s90
      %p99 = scmp.eq.s32.totalorder %s14, 1
      %p100 = por %p98, %p99
      %p101 = scmp.ne.s32.totalorder %s90, %s91
      %p102 = scmp.eq.s32.totalorder %s14, 0
      %p103 = por %p101, %p102
      %p104 = scmp.ne.s32.totalorder %s90, %s91
      %p105 = scmp.eq.s32.totalorder %s15, 1
      %p106 = por %p104, %p105
      %p108 = scmp.ne.s32.totalorder %s91, %s107
      %p109 = scmp.eq.s32.totalorder %s15, 0
      %p110 = por %p108, %p109
      %p111 = scmp.le.s32.totalorder 1, %s9
      %p112 = scmp.lt.s32.totalorder %s9, 3
      %p113 = pnand %p111, %p112
      %p114 = pneg %p113
      // Predicated region
      $region9: #{dqn_forward.3} parent=5 // pred_check
        _
      $region10: #{dqn_forward.3} parent=5 // pred_check_branch
        %116 = sbr.rel (%p113) target = $region12
      $region11: #{dqn_forward.3} parent=5 // pred_region
        %s117 = ssub.s32 %s9, 1
        // Predicated region
        $region13: #{dqn_forward.3} parent=11 // pred_check
          %p118 = pneg %p56
        $region14: #{dqn_forward.3} parent=11 // pred_check_branch
          %120 = sbr.rel (%p118) target = $region16
        $region15: #{dqn_forward.3} parent=11 // pred_region
          _
        $region16: #{dqn_forward.3} parent=11 // pred_fallthru
          _
        // Predicated region
        $region17: #{dqn_forward.3} parent=11 // pred_check
          %p121 = pneg %p77
        $region18: #{dqn_forward.3} parent=11 // pred_check_branch
          %123 = sbr.rel (%p121) target = $region20
        $region19: #{dqn_forward.3} parent=11 // pred_region
          _
        $region20: #{dqn_forward.3} parent=11 // pred_fallthru
          _
      $region12: #{dqn_forward.3} parent=5 // pred_fallthru
        _
      %p124 = scmp.lt.s32.totalorder %s9, 2
      // Predicated region
      $region21: #{dqn_forward.3} parent=5 // pred_check
        %p125 = pneg %p124
      $region22: #{dqn_forward.3} parent=5 // pred_check_branch
        %127 = sbr.rel (%p125) target = $region24
      $region23: #{dqn_forward.3} parent=5 // pred_region
        // Predicated region
        $region25: #{dqn_forward.3} parent=23 // pred_check
          %p128 = pneg %p29
        $region26: #{dqn_forward.3} parent=23 // pred_check_branch
          %130 = sbr.rel (%p128) target = $region28
        $region27: #{dqn_forward.3} parent=23 // pred_region
          %s131 = smul.u32 12, %s9
          %s132 = ssub.s32 21, %s131
          %p133 = scmp.lt.s32.totalorder %s132, 12
          %s134 = scalar_select %p133, %s132, 12
          %s135 = smul.u32 64, %s134
          %s136 = smul.u32 %s135, 2
          %p137 = scmp.lt.s32.totalorder %s131, 20
          %s138 = scalar_select %p137, %s131, 20
          %s139 = smul.addr %s138, 2
          %s140 = smul.addr %s139, 4
          %s141 = scalar_lea.vmem %s0, %s140
          %s142 = smul.u32 12, %s9
          %s143 = ssub.s32 21, %s142
          %p144 = scmp.lt.s32.totalorder %s143, 12
          %s145 = scalar_select %p144, %s143, 12
          %s146 = smul.u32 64, %s145
          %s147 = smul.u32 %s146, 2
        $region28: #{dqn_forward.3} parent=23 // pred_fallthru
          _
      $region24: #{dqn_forward.3} parent=5 // pred_fallthru
        _
      %p148 = scmp.le.s32.totalorder 1, %s9
      %p149 = scmp.lt.s32.totalorder %s9, 3
      %p150 = pnand %p148, %p149
      %p151 = pneg %p150
      // Predicated region
      $region29: #{dqn_forward.3} parent=5 // pred_check
        _
      $region30: #{dqn_forward.3} parent=5 // pred_check_branch
        %153 = sbr.rel (%p150) target = $region32
      $region31: #{dqn_forward.3} parent=5 // pred_region
        %s154 = ssub.s32 %s9, 1
        %s155 = smul.u32 12, %s14
        %s156 = ssub.s32 21, %s155
        %p157 = scmp.lt.s32.totalorder %s156, 12
        %s158 = scalar_select %p157, %s156, 12
        %s159 = smul.u32 64, %s158
        %s160 = smul.u32 %s159, 2
        %p161 = scmp.lt.s32.totalorder %s155, 20
        %s162 = scalar_select %p161, %s155, 20
        %s163 = smul.addr %s162, 2
        %s164 = smul.addr %s163, 4
        %s165 = scalar_lea.vmem %s0, %s164
        %p166 = pneg %p35
        %p167 = pneg %p32
        %p168 = pneg %p56
        %p169 = pneg %p53
        %p170 = pneg %p77
        %p171 = pneg %p74
        %p172 = pneg %p103
        %p173 = pneg %p100
        %s174 = sand.u32 %s90, 1
        %s175 = sand.u32 %s90, 1
        %s176 = smul.addr %s175, 48
        %s177 = scalar_lea.vmem [#allocation2], %s176
        %s178 = smul.u32 12, %s14
        %s179 = ssub.s32 21, %s178
        %p180 = scmp.lt.s32.totalorder %s179, 12
        %s181 = scalar_select %p180, %s179, 12
        %s182 = smul.u32 64, %s181
        %s183 = smul.u32 %s182, 2
        %p184 = scmp.lt.s32.totalorder %s178, 20
        %s185 = scalar_select %p184, %s178, 20
        %s186 = smul.addr %s185, 2
        %s187 = smul.addr %s186, 4
        %s188 = scalar_lea.vmem %s0, %s187
        %s189 = smul.u32 12, %s14
        %s190 = ssub.s32 21, %s189
        %p191 = scmp.lt.s32.totalorder %s190, 12
        %s192 = scalar_select %p191, %s190, 12
        %s193 = smul.u32 64, %s192
        %s194 = smul.u32 %s193, 2
        %s195 = smul.u32 12, %s14
        %s196 = ssub.s32 21, %s195
        %p197 = scmp.lt.s32.totalorder %s196, 12
        %s198 = scalar_select %p197, %s196, 12
        %s199 = smul.u32 64, %s198
        %v201 = vld [vmem:[%s188] sm:$0xff]
        %v202 = vld [vmem:[%s188 + $0x8] sm:$0xff]
        %v203 = vld [vmem:[%s188 + $0x10] sm:$0xff]
        %v204 = vld [vmem:[%s188 + $0x18] sm:$0xff]
        %v205 = vld [vmem:[%s188 + $0x20] sm:$0xff]
        %v206 = vld [vmem:[%s188 + $0x28] sm:$0xff]
        %v207 = vld [vmem:[%s188 + $0x30] sm:$0xff]
        %v208 = vld [vmem:[%s188 + $0x38] sm:$0xff]
        %v209 = vld [vmem:[%s188 + $0x40] sm:$0xff]
        %v210 = vld [vmem:[%s188 + $0x48] sm:$0xff]
        %v211 = vld [vmem:[%s188 + $0x50] sm:$0xff]
        %v212 = vld [vmem:[%s188 + $0x58] sm:$0xff]
        %v213 = vld [vmem:[%s1] sm:$0xf]
        %v214 = vld [vmem:[%s1 + $0x4] sm:$0xf]
        %v215 = vld [vmem:[%s1 + $0x8] sm:$0xf]
        %v216 = vld [vmem:[%s1 + $0xc] sm:$0xf]
        %v217 = vld [vmem:[%s1 + $0x10] sm:$0xf]
        %v218 = vld [vmem:[%s1 + $0x14] sm:$0xf]
        %v219 = vld [vmem:[%s1 + $0x18] sm:$0xf]
        %v220 = vld [vmem:[%s1 + $0x1c] sm:$0xf]
        %v221 = vld [vmem:[%s1 + $0x20] sm:$0xf]
        %v222 = vld [vmem:[%s1 + $0x24] sm:$0xf]
        %v223 = vld [vmem:[%s1 + $0x28] sm:$0xf]
        %v224 = vld [vmem:[%s1 + $0x2c] sm:$0xf]
        %v225 = vld [vmem:[%s1 + $0x30] sm:$0xf]
        %v226 = vld [vmem:[%s1 + $0x34] sm:$0xf]
        %v227 = vld [vmem:[%s1 + $0x38] sm:$0xf]
        %v228 = vld [vmem:[%s1 + $0x3c] sm:$0xf]
        %v229 = vld [vmem:[%s1 + $0x40] sm:$0xf]
        %v230 = vld [vmem:[%s1 + $0x44] sm:$0xf]
        %v231 = vld [vmem:[%s1 + $0x48] sm:$0xf]
        %v232 = vld [vmem:[%s1 + $0x4c] sm:$0xf]
        %v233 = vld [vmem:[%s1 + $0x50] sm:$0xf]
        %v234 = vld [vmem:[%s1 + $0x54] sm:$0xf]
        %v235 = vld [vmem:[%s1 + $0x58] sm:$0xf]
        %v236 = vld [vmem:[%s1 + $0x5c] sm:$0xf]
        %v237 = vld [vmem:[%s1 + $0x60] sm:$0xf]
        %v238 = vld [vmem:[%s1 + $0x64] sm:$0xf]
        %v239 = vld [vmem:[%s1 + $0x68] sm:$0xf]
        %v240 = vld [vmem:[%s1 + $0x6c] sm:$0xf]
        %v241 = vld [vmem:[%s1 + $0x70] sm:$0xf]
        %v242 = vld [vmem:[%s1 + $0x74] sm:$0xf]
        %v243 = vld [vmem:[%s1 + $0x78] sm:$0xf]
        %v244 = vld [vmem:[%s1 + $0x7c] sm:$0xf]
        %v245 = vld [vmem:[%s2] sm:$0x1]
        %v247 = vlaneseq
        %v248 = vshrl.u32 %v247, 7
        %v249 = vsub.s32 0, %v248
        %v250 = vrot.slane %v245, %v249
        %v264 = vunpack.c.l.b16 %v201
        %v265 = vunpack.c.h.b16 %v201
        %v266 = vunpack.c.l.b16 %v202
        %v267 = vunpack.c.h.b16 %v202
        %v268 = vunpack.c.l.b16 %v203
        %v269 = vunpack.c.h.b16 %v203
        %v270 = vunpack.c.l.b16 %v204
        %v271 = vunpack.c.h.b16 %v204
        %v272 = vunpack.c.l.b16 %v205
        %v273 = vunpack.c.h.b16 %v205
        %v274 = vunpack.c.l.b16 %v206
        %v275 = vunpack.c.h.b16 %v206
        %v276 = vunpack.c.l.b16 %v207
        %v277 = vunpack.c.h.b16 %v207
        %v278 = vunpack.c.l.b16 %v208
        %v279 = vunpack.c.h.b16 %v208
        %v280 = vunpack.c.l.b16 %v209
        %v281 = vunpack.c.h.b16 %v209
        %v282 = vunpack.c.l.b16 %v210
        %v283 = vunpack.c.h.b16 %v210
        %v284 = vunpack.c.l.b16 %v211
        %v285 = vunpack.c.h.b16 %v211
        %v286 = vunpack.c.l.b16 %v212
        %v287 = vunpack.c.h.b16 %v212
        %v288 = vpack.c.b16 %v266, %v264
        %v289 = vpack.c.b16 %v267, %v265
        %v290 = vpack.c.b16 %v270, %v268
        %v291 = vpack.c.b16 %v271, %v269
        %v292 = vpack.c.b16 %v274, %v272
        %v293 = vpack.c.b16 %v275, %v273
        %v294 = vpack.c.b16 %v278, %v276
        %v295 = vpack.c.b16 %v279, %v277
        %v296 = vpack.c.b16 %v282, %v280
        %v297 = vpack.c.b16 %v283, %v281
        %v298 = vpack.c.b16 %v286, %v284
        %v299 = vpack.c.b16 %v287, %v285
        %v344 = vunpack.c.l.b16 %v213
        %v345 = vunpack.c.l.b16 %v214
        %v346 = vunpack.c.l.b16 %v215
        %v347 = vunpack.c.l.b16 %v216
        %v348 = vunpack.c.l.b16 %v217
        %v349 = vunpack.c.l.b16 %v218
        %v350 = vunpack.c.l.b16 %v219
        %v351 = vunpack.c.l.b16 %v220
        %v352 = vunpack.c.l.b16 %v221
        %v353 = vunpack.c.l.b16 %v222
        %v354 = vunpack.c.l.b16 %v223
        %v355 = vunpack.c.l.b16 %v224
        %v356 = vunpack.c.l.b16 %v225
        %v357 = vunpack.c.l.b16 %v226
        %v358 = vunpack.c.l.b16 %v227
        %v359 = vunpack.c.l.b16 %v228
        %v360 = vunpack.c.l.b16 %v229
        %v361 = vunpack.c.l.b16 %v230
        %v362 = vunpack.c.l.b16 %v231
        %v363 = vunpack.c.l.b16 %v232
        %v364 = vunpack.c.l.b16 %v233
        %v365 = vunpack.c.l.b16 %v234
        %v366 = vunpack.c.l.b16 %v235
        %v367 = vunpack.c.l.b16 %v236
        %v368 = vunpack.c.l.b16 %v237
        %v369 = vunpack.c.l.b16 %v238
        %v370 = vunpack.c.l.b16 %v239
        %v371 = vunpack.c.l.b16 %v240
        %v372 = vunpack.c.l.b16 %v241
        %v373 = vunpack.c.l.b16 %v242
        %v374 = vunpack.c.l.b16 %v243
        %v375 = vunpack.c.l.b16 %v244
        %v376 = vpack.c.b16 %v345, %v344
        %v377 = vpack.c.b16 %v347, %v346
        %v378 = vpack.c.b16 %v349, %v348
        %v379 = vpack.c.b16 %v351, %v350
        %v380 = vpack.c.b16 %v353, %v352
        %v381 = vpack.c.b16 %v355, %v354
        %v382 = vpack.c.b16 %v357, %v356
        %v383 = vpack.c.b16 %v359, %v358
        %v384 = vpack.c.b16 %v361, %v360
        %v385 = vpack.c.b16 %v363, %v362
        %v386 = vpack.c.b16 %v365, %v364
        %v387 = vpack.c.b16 %v367, %v366
        %v388 = vpack.c.b16 %v369, %v368
        %v389 = vpack.c.b16 %v371, %v370
        %v390 = vpack.c.b16 %v373, %v372
        %v391 = vpack.c.b16 %v375, %v374
        %408 = vmatprep.subr.bf16.mxu0 0
        %409 = vmatpush1.bf16.msra.mxu0 %v376
        %410 = vmatprep.subr.bf16.mxu0 0
        %411 = vmatpush1.bf16.msra.mxu0 %v377
        %412 = vmatprep.subr.bf16.mxu0 0
        %413 = vmatpush1.bf16.msra.mxu0 %v378
        %414 = vmatprep.subr.bf16.mxu0 0
        %415 = vmatpush1.bf16.msra.mxu0 %v379
        %416 = vmatprep.subr.bf16.mxu0 0
        %417 = vmatpush1.bf16.msra.mxu0 %v380
        %418 = vmatprep.subr.bf16.mxu0 0
        %419 = vmatpush1.bf16.msra.mxu0 %v381
        %420 = vmatprep.subr.bf16.mxu0 0
        %421 = vmatpush1.bf16.msra.mxu0 %v382
        %422 = vmatprep.subr.bf16.mxu0 0
        %423 = vmatpush1.bf16.msra.mxu0 %v383
        %424 = vmatprep.subr.bf16.mxu0 0
        %425 = vmatpush1.bf16.msra.mxu0 %v384
        %426 = vmatprep.subr.bf16.mxu0 0
        %427 = vmatpush1.bf16.msra.mxu0 %v385
        %428 = vmatprep.subr.bf16.mxu0 0
        %429 = vmatpush1.bf16.msra.mxu0 %v386
        %430 = vmatprep.subr.bf16.mxu0 0
        %431 = vmatpush1.bf16.msra.mxu0 %v387
        %432 = vmatprep.subr.bf16.mxu0 0
        %433 = vmatpush1.bf16.msra.mxu0 %v388
        %434 = vmatprep.subr.bf16.mxu0 0
        %435 = vmatpush1.bf16.msra.mxu0 %v389
        %436 = vmatprep.subr.bf16.mxu0 0
        %437 = vmatpush1.bf16.msra.mxu0 %v390
        %438 = vmatprep.subr.bf16.mxu0 0
        %439 = vmatpush1.bf16.msra.mxu0 %v391
        %440 = vmatprep.mubr.bf16.mxu0 %v289
        %441 = vmatmul.mubr.bf16.gmra.mrb[0].mxu0 %v288
        %v442 = vpop.f32.mrb[0].mxu0
        %v443 = vadd.f32 %v250, %v442
        %v444 = vpop.f32.mrb[0].mxu0
        %v445 = vpop.f32.mrb[0].mxu0
        %v446 = vadd.f32 %v250, %v445
        %v447 = vpop.f32.mrb[0].mxu0
        %448 = vmatprep.mubr.bf16.mxu0 %v291
        %449 = vmatmul.mubr.bf16.gmra.mrb[0].mxu0 %v290
        %v450 = vpop.f32.mrb[0].mxu0
        %v451 = vadd.f32 %v250, %v450
        %v452 = vpop.f32.mrb[0].mxu0
        %v453 = vpop.f32.mrb[0].mxu0
        %v454 = vadd.f32 %v250, %v453
        %v455 = vpop.f32.mrb[0].mxu0
        %456 = vmatprep.mubr.bf16.mxu0 %v293
        %457 = vmatmul.mubr.bf16.gmra.mrb[0].mxu0 %v292
        %v458 = vpop.f32.mrb[0].mxu0
        %v459 = vadd.f32 %v250, %v458
        %v460 = vpop.f32.mrb[0].mxu0
        %v461 = vpop.f32.mrb[0].mxu0
        %v462 = vadd.f32 %v250, %v461
        %v463 = vpop.f32.mrb[0].mxu0
        %464 = vmatprep.mubr.bf16.mxu0 %v295
        %465 = vmatmul.mubr.bf16.gmra.mrb[0].mxu0 %v294
        %v466 = vpop.f32.mrb[0].mxu0
        %v467 = vadd.f32 %v250, %v466
        %v468 = vpop.f32.mrb[0].mxu0
        %v469 = vpop.f32.mrb[0].mxu0
        %v470 = vadd.f32 %v250, %v469
        %v471 = vpop.f32.mrb[0].mxu0
        %472 = vmatprep.mubr.bf16.mxu0 %v297
        %473 = vmatmul.mubr.bf16.gmra.mrb[0].mxu0 %v296
        %v474 = vpop.f32.mrb[0].mxu0
        %v475 = vadd.f32 %v250, %v474
        %v476 = vpop.f32.mrb[0].mxu0
        %v477 = vpop.f32.mrb[0].mxu0
        %v478 = vadd.f32 %v250, %v477
        %v479 = vpop.f32.mrb[0].mxu0
        %480 = vmatprep.mubr.bf16.mxu0 %v299
        %481 = vmatmul.mubr.bf16.gmra.mrb[0].mxu0 %v298
        %v482 = vpop.f32.mrb[0].mxu0
        %v483 = vadd.f32 %v250, %v482
        %v484 = vpop.f32.mrb[0].mxu0
        %v485 = vpop.f32.mrb[0].mxu0
        %v486 = vadd.f32 %v250, %v485
        %v487 = vpop.f32.mrb[0].mxu0
        %488 = vdwg.mxu0
        %v489 = vmul.f32 %v443, 0.01
        %v490 = vmul.f32 %v446, 0.01
        %v491 = vmul.f32 %v451, 0.01
        %v492 = vmul.f32 %v454, 0.01
        %v493 = vmul.f32 %v459, 0.01
        %v494 = vmul.f32 %v462, 0.01
        %v495 = vmul.f32 %v467, 0.01
        %v496 = vmul.f32 %v470, 0.01
        %v497 = vmul.f32 %v475, 0.01
        %v498 = vmul.f32 %v478, 0.01
        %v499 = vmul.f32 %v483, 0.01
        %v500 = vmul.f32 %v486, 0.01
        %v501 = vmax.f32 %v443, %v489
        %v502 = vmax.f32 %v446, %v490
        %v503 = vmax.f32 %v451, %v491
        %v504 = vmax.f32 %v454, %v492
        %v505 = vmax.f32 %v459, %v493
        %v506 = vmax.f32 %v462, %v494
        %v507 = vmax.f32 %v467, %v495
        %v508 = vmax.f32 %v470, %v496
        %v509 = vmax.f32 %v475, %v497
        %v510 = vmax.f32 %v478, %v498
        %v511 = vmax.f32 %v483, %v499
        %v512 = vmax.f32 %v486, %v500
        %v513 = vpack.c.bf16 %v502, %v501
        %v514 = vpack.c.bf16 %v504, %v503
        %v515 = vpack.c.bf16 %v506, %v505
        %v516 = vpack.c.bf16 %v508, %v507
        %v517 = vpack.c.bf16 %v510, %v509
        %v518 = vpack.c.bf16 %v512, %v511
        %v525 = vunpack.c.l.b16 %v513
        %v526 = vunpack.c.h.b16 %v513
        %v527 = vunpack.c.l.b16 %v514
        %v528 = vunpack.c.h.b16 %v514
        %v529 = vunpack.c.l.b16 %v515
        %v530 = vunpack.c.h.b16 %v515
        %v531 = vunpack.c.l.b16 %v516
        %v532 = vunpack.c.h.b16 %v516
        %v533 = vunpack.c.l.b16 %v517
        %v534 = vunpack.c.h.b16 %v517
        %v535 = vunpack.c.l.b16 %v518
        %v536 = vunpack.c.h.b16 %v518
        %v537 = vpack.c.b16 %v525, %v525
        %v538 = vpack.c.b16 %v526, %v526
        %v539 = vpack.c.b16 %v527, %v527
        %v540 = vpack.c.b16 %v528, %v528
        %v541 = vpack.c.b16 %v529, %v529
        %v542 = vpack.c.b16 %v530, %v530
        %v543 = vpack.c.b16 %v531, %v531
        %v544 = vpack.c.b16 %v532, %v532
        %v545 = vpack.c.b16 %v533, %v533
        %v546 = vpack.c.b16 %v534, %v534
        %v547 = vpack.c.b16 %v535, %v535
        %v548 = vpack.c.b16 %v536, %v536
        %561 = vst [vmem:[%s177] sm:$0xf] %v537
        %562 = vst [vmem:[%s177 + $0x4] sm:$0xf] %v538
        %563 = vst [vmem:[%s177 + $0x8] sm:$0xf] %v539
        %564 = vst [vmem:[%s177 + $0xc] sm:$0xf] %v540
        %565 = vst [vmem:[%s177 + $0x10] sm:$0xf] %v541
        %566 = vst [vmem:[%s177 + $0x14] sm:$0xf] %v542
        %567 = vst [vmem:[%s177 + $0x18] sm:$0xf] %v543
        %568 = vst [vmem:[%s177 + $0x1c] sm:$0xf] %v544
        %569 = vst [vmem:[%s177 + $0x20] sm:$0xf] %v545
        %570 = vst [vmem:[%s177 + $0x24] sm:$0xf] %v546
        %571 = vst [vmem:[%s177 + $0x28] sm:$0xf] %v547
        %572 = vst [vmem:[%s177 + $0x2c] sm:$0xf] %v548
        %s573 = sand.u32 %s90, 1
        %s574 = sand.u32 %s90, 1
        %s575 = smul.addr %s574, 48
        %s576 = scalar_lea.vmem [#allocation2], %s575
        // Predicated region
        $region33: #{dqn_forward.3} parent=31 // pred_check
          %p577 = pneg %p100
        $region34: #{dqn_forward.3} parent=31 // pred_check_branch
          %579 = sbr.rel (%p577) target = $region36
        $region35: #{dqn_forward.3} parent=31 // pred_region
          %s580 = smul.u32 12, %s14
          %s581 = ssub.s32 21, %s580
          %p582 = scmp.lt.s32.totalorder %s581, 12
          %s583 = scalar_select %p582, %s581, 12
          %s584 = smul.u32 64, %s583
          %p585 = scmp.ne.s32.totalorder 0, %s584
          %s586 = smul.addr %s580, 4
          %s587 = scalar_lea.vmem %s3, %s586
          // Predicated region
          $region37: #{dqn_forward.3} parent=35 // pred_check
            %p588 = pneg %p585
          $region38: #{dqn_forward.3} parent=35 // pred_check_branch
            %590 = sbr.rel (%p588) target = $region40
          $region39: #{dqn_forward.3} parent=35 // pred_region
            // Predicated region
            $region41: #{dqn_forward.3} parent=39 // pred_check
              _
            $region42: #{dqn_forward.3} parent=39 // pred_check_branch
              %592 = sbr.rel target = $region44
            $region43: #{dqn_forward.3} parent=39 // pred_region
              // Predicated region
              $region63: #{dqn_forward.3} parent=43 // pred_check
                _
              $region64: #{dqn_forward.3} parent=43 // pred_check_branch
                %664 = sbr.rel (0) target = $region66
              $region65: #{dqn_forward.3} parent=43 // pred_region
                %s666 = sdiv.u32.pop %s583, 12
                %s667 = srem.u32.pop %s583, 12
                // While loop
                $region67: #{dqn_forward.3} parent=65 // loop_pre_header
                  _
                $region68: #{dqn_forward.3} parent=65 // loop_header
                  %s669 = sphi 0, %s671
                  %p670 = scmp.ge.s32.totalorder %s669, %s666
                  %s674 = sphi 0, %s703
                  %s675 = sphi %s576, %s706
                  %s676 = sphi %s587, %s707
                $region69: #{dqn_forward.3} parent=65 // loop_header_branch
                  %673 = sbr.rel (%p670) target = $region73
                $region70: #{dqn_forward.3} parent=65 // loop_body
                  %v677 = vld [vmem:[%s675] sm:$0xf]
                  %678 = vst [vmem:[%s676] sm:$0xf] %v677
                  %v679 = vld [vmem:[%s675 + $0x4] sm:$0xf]
                  %680 = vst [vmem:[%s676 + $0x4] sm:$0xf] %v679
                  %v681 = vld [vmem:[%s675 + $0x8] sm:$0xf]
                  %682 = vst [vmem:[%s676 + $0x8] sm:$0xf] %v681
                  %v683 = vld [vmem:[%s675 + $0xc] sm:$0xf]
                  %684 = vst [vmem:[%s676 + $0xc] sm:$0xf] %v683
                  %v685 = vld [vmem:[%s675 + $0x10] sm:$0xf]
                  %686 = vst [vmem:[%s676 + $0x10] sm:$0xf] %v685
                  %v687 = vld [vmem:[%s675 + $0x14] sm:$0xf]
                  %688 = vst [vmem:[%s676 + $0x14] sm:$0xf] %v687
                  %v689 = vld [vmem:[%s675 + $0x18] sm:$0xf]
                  %690 = vst [vmem:[%s676 + $0x18] sm:$0xf] %v689
                  %v691 = vld [vmem:[%s675 + $0x1c] sm:$0xf]
                  %692 = vst [vmem:[%s676 + $0x1c] sm:$0xf] %v691
                  %v693 = vld [vmem:[%s675 + $0x20] sm:$0xf]
                  %694 = vst [vmem:[%s676 + $0x20] sm:$0xf] %v693
                  %v695 = vld [vmem:[%s675 + $0x24] sm:$0xf]
                  %696 = vst [vmem:[%s676 + $0x24] sm:$0xf] %v695
                  %v697 = vld [vmem:[%s675 + $0x28] sm:$0xf]
                  %698 = vst [vmem:[%s676 + $0x28] sm:$0xf] %v697
                  %v699 = vld [vmem:[%s675 + $0x2c] sm:$0xf]
                  %700 = vst [vmem:[%s676 + $0x2c] sm:$0xf] %v699
                  %s701 = sadd.s32 1, %s674
                  %p702 = scmp.ge.s32.totalorder %s701, %s666
                  %s703 = scalar_select %p702, 0, %s701
                  %s704 = smul.u32 %s703, 48
                  %s705 = smul.u32 %s703, 48
                  %s706 = scalar_lea.vmem %s576, %s704 [#allocation2]
                  %s707 = scalar_lea.vmem %s587, %s705
                $region71: #{dqn_forward.3} parent=65 // loop_footer
                  %s671 = sadd.s32 %s669, 1
                $region72: #{dqn_forward.3} parent=65 // loop_footer_branch
                  %668 = sbr.rel target = $region68
                $region73: #{dqn_forward.3} parent=65 // loop_exit
                  _
                %s708 = sdiv.u32.pop %s583, 12
                %s709 = srem.u32.pop %s583, 12
                %s710 = smul.u32 %s708, 12
                %s711 = smul.u32 4, %s710
                %s712 = scalar_lea.vmem %s576, %s711 [#allocation2]
                %s713 = smul.u32 4, %s710
                %s714 = scalar_lea.vmem %s587, %s713
                // While loop
                $region74: #{dqn_forward.3} parent=65 // loop_pre_header
                  _
                $region75: #{dqn_forward.3} parent=65 // loop_header
                  %s716 = sphi 0, %s718
                  %p717 = scmp.ge.s32.totalorder %s716, %s709
                  %s721 = sphi 0, %s728
                  %s722 = sphi %s712, %s731
                  %s723 = sphi %s714, %s732
                $region76: #{dqn_forward.3} parent=65 // loop_header_branch
                  %720 = sbr.rel (%p717) target = $region80
                $region77: #{dqn_forward.3} parent=65 // loop_body
                  %v724 = vld [vmem:[%s722] sm:$0xf]
                  %725 = vst [vmem:[%s723] sm:$0xf] %v724
                  %s726 = sadd.s32 1, %s721
                  %p727 = scmp.ge.s32.totalorder %s726, %s709
                  %s728 = scalar_select %p727, 0, %s726
                  %s729 = smul.u32 %s728, 4
                  %s730 = smul.u32 %s728, 4
                  %s731 = scalar_lea.vmem %s712, %s729 [#allocation2]
                  %s732 = scalar_lea.vmem %s714, %s730
                $region78: #{dqn_forward.3} parent=65 // loop_footer
                  %s718 = sadd.s32 %s716, 1
                $region79: #{dqn_forward.3} parent=65 // loop_footer_branch
                  %715 = sbr.rel target = $region75
                $region80: #{dqn_forward.3} parent=65 // loop_exit
                  _
              $region66: #{dqn_forward.3} parent=43 // pred_fallthru
                _
            $region44: #{dqn_forward.3} parent=39 // pred_fallthru
              _
            // Predicated region
            $region45: #{dqn_forward.3} parent=39 // pred_check
              _
            $region46: #{dqn_forward.3} parent=39 // pred_check_branch
              %594 = sbr.rel (0) target = $region48
            $region47: #{dqn_forward.3} parent=39 // pred_region
              %s596 = sdiv.u32.pop %s583, 12
              %s597 = srem.u32.pop %s583, 12
              // While loop
              $region49: #{dqn_forward.3} parent=47 // loop_pre_header
                _
              $region50: #{dqn_forward.3} parent=47 // loop_header
                %s599 = sphi 0, %s601
                %p600 = scmp.ge.s32.totalorder %s599, %s596
                %s604 = sphi 0, %s633
                %s605 = sphi %s576, %s636
                %s606 = sphi %s587, %s637
              $region51: #{dqn_forward.3} parent=47 // loop_header_branch
                %603 = sbr.rel (%p600) target = $region55
              $region52: #{dqn_forward.3} parent=47 // loop_body
                %v607 = vld [vmem:[%s605] sm:$0xf]
                %608 = vst [vmem:[%s606] sm:$0xf] %v607
                %v609 = vld [vmem:[%s605 + $0x4] sm:$0xf]
                %610 = vst [vmem:[%s606 + $0x4] sm:$0xf] %v609
                %v611 = vld [vmem:[%s605 + $0x8] sm:$0xf]
                %612 = vst [vmem:[%s606 + $0x8] sm:$0xf] %v611
                %v613 = vld [vmem:[%s605 + $0xc] sm:$0xf]
                %614 = vst [vmem:[%s606 + $0xc] sm:$0xf] %v613
                %v615 = vld [vmem:[%s605 + $0x10] sm:$0xf]
                %616 = vst [vmem:[%s606 + $0x10] sm:$0xf] %v615
                %v617 = vld [vmem:[%s605 + $0x14] sm:$0xf]
                %618 = vst [vmem:[%s606 + $0x14] sm:$0xf] %v617
                %v619 = vld [vmem:[%s605 + $0x18] sm:$0xf]
                %620 = vst [vmem:[%s606 + $0x18] sm:$0xf] %v619
                %v621 = vld [vmem:[%s605 + $0x1c] sm:$0xf]
                %622 = vst [vmem:[%s606 + $0x1c] sm:$0xf] %v621
                %v623 = vld [vmem:[%s605 + $0x20] sm:$0xf]
                %624 = vst [vmem:[%s606 + $0x20] sm:$0xf] %v623
                %v625 = vld [vmem:[%s605 + $0x24] sm:$0xf]
                %626 = vst [vmem:[%s606 + $0x24] sm:$0xf] %v625
                %v627 = vld [vmem:[%s605 + $0x28] sm:$0xf]
                %628 = vst [vmem:[%s606 + $0x28] sm:$0xf] %v627
                %v629 = vld [vmem:[%s605 + $0x2c] sm:$0xf]
                %630 = vst [vmem:[%s606 + $0x2c] sm:$0xf] %v629
                %s631 = sadd.s32 1, %s604
                %p632 = scmp.ge.s32.totalorder %s631, %s596
                %s633 = scalar_select %p632, 0, %s631
                %s634 = smul.u32 %s633, 48
                %s635 = smul.u32 %s633, 48
                %s636 = scalar_lea.vmem %s576, %s634 [#allocation2]
                %s637 = scalar_lea.vmem %s587, %s635
              $region53: #{dqn_forward.3} parent=47 // loop_footer
                %s601 = sadd.s32 %s599, 1
              $region54: #{dqn_forward.3} parent=47 // loop_footer_branch
                %598 = sbr.rel target = $region50
              $region55: #{dqn_forward.3} parent=47 // loop_exit
                _
              %s638 = sdiv.u32.pop %s583, 12
              %s639 = srem.u32.pop %s583, 12
              %s640 = smul.u32 %s638, 12
              %s641 = smul.u32 4, %s640
              %s642 = scalar_lea.vmem %s576, %s641 [#allocation2]
              %s643 = smul.u32 4, %s640
              %s644 = scalar_lea.vmem %s587, %s643
              // While loop
              $region56: #{dqn_forward.3} parent=47 // loop_pre_header
                _
              $region57: #{dqn_forward.3} parent=47 // loop_header
                %s646 = sphi 0, %s648
                %p647 = scmp.ge.s32.totalorder %s646, %s639
                %s651 = sphi 0, %s658
                %s652 = sphi %s642, %s661
                %s653 = sphi %s644, %s662
              $region58: #{dqn_forward.3} parent=47 // loop_header_branch
                %650 = sbr.rel (%p647) target = $region62
              $region59: #{dqn_forward.3} parent=47 // loop_body
                %v654 = vld [vmem:[%s652] sm:$0xf]
                %655 = vst [vmem:[%s653] sm:$0xf] %v654
                %s656 = sadd.s32 1, %s651
                %p657 = scmp.ge.s32.totalorder %s656, %s639
                %s658 = scalar_select %p657, 0, %s656
                %s659 = smul.u32 %s658, 4
                %s660 = smul.u32 %s658, 4
                %s661 = scalar_lea.vmem %s642, %s659 [#allocation2]
                %s662 = scalar_lea.vmem %s644, %s660
              $region60: #{dqn_forward.3} parent=47 // loop_footer
                %s648 = sadd.s32 %s646, 1
              $region61: #{dqn_forward.3} parent=47 // loop_footer_branch
                %645 = sbr.rel target = $region57
              $region62: #{dqn_forward.3} parent=47 // loop_exit
                _
            $region48: #{dqn_forward.3} parent=39 // pred_fallthru
              _
          $region40: #{dqn_forward.3} parent=35 // pred_fallthru
            _
          %733 = vnop
        $region36: #{dqn_forward.3} parent=31 // pred_fallthru
          _
      $region32: #{dqn_forward.3} parent=5 // pred_fallthru
        _
      %p734 = scmp.le.s32.totalorder 2, %s9
      // Predicated region
      $region81: #{dqn_forward.3} parent=5 // pred_check
        %p735 = pneg %p734
      $region82: #{dqn_forward.3} parent=5 // pred_check_branch
        %737 = sbr.rel (%p735) target = $region84
      $region83: #{dqn_forward.3} parent=5 // pred_region
        %s738 = ssub.s32 %s9, 2
        // Predicated region
        $region85: #{dqn_forward.3} parent=83 // pred_check
          %p739 = pneg %p106
        $region86: #{dqn_forward.3} parent=83 // pred_check_branch
          %741 = sbr.rel (%p739) target = $region88
        $region87: #{dqn_forward.3} parent=83 // pred_region
          %s742 = sand.u32 %s91, 1
          %s743 = sand.u32 %s91, 1
          %s744 = smul.addr %s743, 48
          %s745 = scalar_lea.vmem [#allocation2], %s744
        $region88: #{dqn_forward.3} parent=83 // pred_fallthru
          _
      $region84: #{dqn_forward.3} parent=5 // pred_fallthru
        _
    $region6: #{dqn_forward.3} parent=1 // loop_footer
      %s13 = sadd.s32 1, %s9
    $region7: #{dqn_forward.3} parent=1 // loop_footer_branch
      %8 = sbr.rel target = $region3
    $region8: #{dqn_forward.3} parent=1 // loop_exit
      _

// kernel: dqn_forward.4
$region0: #{dqn_forward.4}
  #allocation0 [shape = 'u32[]', space=smem, size = 0x4, offset = 0x4, fixed_abs, tag = 'smem constant byte address 0x4 - core index']
  #allocation1 [shape = 'u32[144,128]{1,0:T(1,128)}', space=vmem, size = 0x12000, scoped, tag = 'internal scratch']
  %s0 = inlined_call_operand.vmem [shape: bf16[18,512], index: 0, kind: input, shape index: {}]
  %s1 = inlined_call_operand.vmem [shape: bf16[512,128], index: 1, kind: input, shape index: {}]
  %s2 = inlined_call_operand.vmem [shape: f32[1,128], index: 2, kind: input, shape index: {}]
  %s3 = inlined_call_operand.vmem [shape: bf16[18,128], index: 3, kind: output, shape index: {}]
  %s4 = sld [smem:[#allocation0]]
  $region59: #{dqn_forward.4} parent=0
    _
  %s6 = ssub.s32 1, %s4
  %s7 = scalar_select 0, %s6, %s4
  $region1: #{dqn_forward.4} parent=0
    #allocation2 [shape = 'u8[8192]{0}', space=vmem, size = 0x2000, scoped, tag = 'output window, operand 0, single buffered']
    // Predicated region
    $region2: #{dqn_forward.4} parent=1 // pred_check
      _
    $region3: #{dqn_forward.4} parent=1 // pred_check_branch
      %9 = sbr.rel (0) target = $region5
    $region4: #{dqn_forward.4} parent=1 // pred_region
      _
    $region5: #{dqn_forward.4} parent=1 // pred_fallthru
      _
    // Predicated region
    $region6: #{dqn_forward.4} parent=1 // pred_check
      _
    $region7: #{dqn_forward.4} parent=1 // pred_check_branch
      %11 = sbr.rel (0) target = $region9
    $region8: #{dqn_forward.4} parent=1 // pred_region
      _
    $region9: #{dqn_forward.4} parent=1 // pred_fallthru
      _
    // Predicated region
    $region10: #{dqn_forward.4} parent=1 // pred_check
      _
    $region11: #{dqn_forward.4} parent=1 // pred_check_branch
      %13 = sbr.rel (0) target = $region13
    $region12: #{dqn_forward.4} parent=1 // pred_region
      _
    $region13: #{dqn_forward.4} parent=1 // pred_fallthru
      _
    %v15 = vld [vmem:[%s0] sm:$0xff]
    %v16 = vld [vmem:[%s0 + $0x8] sm:$0xff]
    %v17 = vld [vmem:[%s0 + $0x10] sm:$0xff]
    %v18 = vld [vmem:[%s0 + $0x18] sm:$0xff]
    %v19 = vld [vmem:[%s0 + $0x20] sm:$0xff]
    %v20 = vld [vmem:[%s0 + $0x28] sm:$0xff]
    %v21 = vld [vmem:[%s0 + $0x30] sm:$0xff]
    %v22 = vld [vmem:[%s0 + $0x38] sm:$0xff]
    %v23 = vld [vmem:[%s1] sm:$0xf]
    %v24 = vld [vmem:[%s1 + $0x4] sm:$0xf]
    %v25 = vld [vmem:[%s1 + $0x8] sm:$0xf]
    %v26 = vld [vmem:[%s1 + $0xc] sm:$0xf]
    %v27 = vld [vmem:[%s1 + $0x10] sm:$0xf]
    %v28 = vld [vmem:[%s1 + $0x14] sm:$0xf]
    %v29 = vld [vmem:[%s1 + $0x18] sm:$0xf]
    %v30 = vld [vmem:[%s1 + $0x1c] sm:$0xf]
    %v31 = vld [vmem:[%s1 + $0x20] sm:$0xf]
    %v32 = vld [vmem:[%s1 + $0x24] sm:$0xf]
    %v33 = vld [vmem:[%s1 + $0x28] sm:$0xf]
    %v34 = vld [vmem:[%s1 + $0x2c] sm:$0xf]
    %v35 = vld [vmem:[%s1 + $0x30] sm:$0xf]
    %v36 = vld [vmem:[%s1 + $0x34] sm:$0xf]
    %v37 = vld [vmem:[%s1 + $0x38] sm:$0xf]
    %v38 = vld [vmem:[%s1 + $0x3c] sm:$0xf]
    %v39 = vld [vmem:[%s1 + $0x40] sm:$0xf]
    %v40 = vld [vmem:[%s1 + $0x44] sm:$0xf]
    %v41 = vld [vmem:[%s1 + $0x48] sm:$0xf]
    %v42 = vld [vmem:[%s1 + $0x4c] sm:$0xf]
    %v43 = vld [vmem:[%s1 + $0x50] sm:$0xf]
    %v44 = vld [vmem:[%s1 + $0x54] sm:$0xf]
    %v45 = vld [vmem:[%s1 + $0x58] sm:$0xf]
    %v46 = vld [vmem:[%s1 + $0x5c] sm:$0xf]
    %v47 = vld [vmem:[%s1 + $0x60] sm:$0xf]
    %v48 = vld [vmem:[%s1 + $0x64] sm:$0xf]
    %v49 = vld [vmem:[%s1 + $0x68] sm:$0xf]
    %v50 = vld [vmem:[%s1 + $0x6c] sm:$0xf]
    %v51 = vld [vmem:[%s1 + $0x70] sm:$0xf]
    %v52 = vld [vmem:[%s1 + $0x74] sm:$0xf]
    %v53 = vld [vmem:[%s1 + $0x78] sm:$0xf]
    %v54 = vld [vmem:[%s1 + $0x7c] sm:$0xf]
    %v55 = vld [vmem:[%s1 + $0x80] sm:$0xf]
    %v56 = vld [vmem:[%s1 + $0x84] sm:$0xf]
    %v57 = vld [vmem:[%s1 + $0x88] sm:$0xf]
    %v58 = vld [vmem:[%s1 + $0x8c] sm:$0xf]
    %v59 = vld [vmem:[%s1 + $0x90] sm:$0xf]
    %v60 = vld [vmem:[%s1 + $0x94] sm:$0xf]
    %v61 = vld [vmem:[%s1 + $0x98] sm:$0xf]
    %v62 = vld [vmem:[%s1 + $0x9c] sm:$0xf]
    %v63 = vld [vmem:[%s1 + $0xa0] sm:$0xf]
    %v64 = vld [vmem:[%s1 + $0xa4] sm:$0xf]
    %v65 = vld [vmem:[%s1 + $0xa8] sm:$0xf]
    %v66 = vld [vmem:[%s1 + $0xac] sm:$0xf]
    %v67 = vld [vmem:[%s1 + $0xb0] sm:$0xf]
    %v68 = vld [vmem:[%s1 + $0xb4] sm:$0xf]
    %v69 = vld [vmem:[%s1 + $0xb8] sm:$0xf]
    %v70 = vld [vmem:[%s1 + $0xbc] sm:$0xf]
    %v71 = vld [vmem:[%s1 + $0xc0] sm:$0xf]
    %v72 = vld [vmem:[%s1 + $0xc4] sm:$0xf]
    %v73 = vld [vmem:[%s1 + $0xc8] sm:$0xf]
    %v74 = vld [vmem:[%s1 + $0xcc] sm:$0xf]
    %v75 = vld [vmem:[%s1 + $0xd0] sm:$0xf]
    %v76 = vld [vmem:[%s1 + $0xd4] sm:$0xf]
    %v77 = vld [vmem:[%s1 + $0xd8] sm:$0xf]
    %v78 = vld [vmem:[%s1 + $0xdc] sm:$0xf]
    %v79 = vld [vmem:[%s1 + $0xe0] sm:$0xf]
    %v80 = vld [vmem:[%s1 + $0xe4] sm:$0xf]
    %v81 = vld [vmem:[%s1 + $0xe8] sm:$0xf]
    %v82 = vld [vmem:[%s1 + $0xec] sm:$0xf]
    %v83 = vld [vmem:[%s1 + $0xf0] sm:$0xf]
    %v84 = vld [vmem:[%s1 + $0xf4] sm:$0xf]
    %v85 = vld [vmem:[%s1 + $0xf8] sm:$0xf]
    %v86 = vld [vmem:[%s1 + $0xfc] sm:$0xf]
    %v87 = vld [vmem:[%s2] sm:$0x1]
    %v89 = vlaneseq
    %v90 = vshrl.u32 %v89, 7
    %v91 = vsub.s32 0, %v90
    %v92 = vrot.slane %v87, %v91
    %v102 = vunpack.c.l.b16 %v15
    %v103 = vunpack.c.h.b16 %v15
    %v104 = vunpack.c.l.b16 %v16
    %v105 = vunpack.c.h.b16 %v16
    %v106 = vunpack.c.l.b16 %v17
    %v107 = vunpack.c.h.b16 %v17
    %v108 = vunpack.c.l.b16 %v18
    %v109 = vunpack.c.h.b16 %v18
    %v110 = vunpack.c.l.b16 %v19
    %v111 = vunpack.c.h.b16 %v19
    %v112 = vunpack.c.l.b16 %v20
    %v113 = vunpack.c.h.b16 %v20
    %v114 = vunpack.c.l.b16 %v21
    %v115 = vunpack.c.h.b16 %v21
    %v116 = vunpack.c.l.b16 %v22
    %v117 = vunpack.c.h.b16 %v22
    %v118 = vpack.c.b16 %v106, %v102
    %v119 = vpack.c.b16 %v107, %v103
    %v120 = vpack.c.b16 %v108, %v104
    %v121 = vpack.c.b16 %v109, %v105
    %v122 = vpack.c.b16 %v114, %v110
    %v123 = vpack.c.b16 %v115, %v111
    %v124 = vpack.c.b16 %v116, %v112
    %v125 = vpack.c.b16 %v117, %v113
    %v198 = vunpack.c.l.b16 %v23
    %v199 = vunpack.c.l.b16 %v24
    %v200 = vunpack.c.l.b16 %v25
    %v201 = vunpack.c.l.b16 %v26
    %v202 = vunpack.c.l.b16 %v27
    %v203 = vunpack.c.l.b16 %v28
    %v204 = vunpack.c.l.b16 %v29
    %v205 = vunpack.c.l.b16 %v30
    %v206 = vunpack.c.l.b16 %v31
    %v207 = vunpack.c.l.b16 %v32
    %v208 = vunpack.c.l.b16 %v33
    %v209 = vunpack.c.l.b16 %v34
    %v210 = vunpack.c.l.b16 %v35
    %v211 = vunpack.c.l.b16 %v36
    %v212 = vunpack.c.l.b16 %v37
    %v213 = vunpack.c.l.b16 %v38
    %v214 = vunpack.c.l.b16 %v39
    %v215 = vunpack.c.l.b16 %v40
    %v216 = vunpack.c.l.b16 %v41
    %v217 = vunpack.c.l.b16 %v42
    %v218 = vunpack.c.l.b16 %v43
    %v219 = vunpack.c.l.b16 %v44
    %v220 = vunpack.c.l.b16 %v45
    %v221 = vunpack.c.l.b16 %v46
    %v222 = vunpack.c.l.b16 %v47
    %v223 = vunpack.c.l.b16 %v48
    %v224 = vunpack.c.l.b16 %v49
    %v225 = vunpack.c.l.b16 %v50
    %v226 = vunpack.c.l.b16 %v51
    %v227 = vunpack.c.l.b16 %v52
    %v228 = vunpack.c.l.b16 %v53
    %v229 = vunpack.c.l.b16 %v54
    %v230 = vunpack.c.l.b16 %v55
    %v231 = vunpack.c.l.b16 %v56
    %v232 = vunpack.c.l.b16 %v57
    %v233 = vunpack.c.l.b16 %v58
    %v234 = vunpack.c.l.b16 %v59
    %v235 = vunpack.c.l.b16 %v60
    %v236 = vunpack.c.l.b16 %v61
    %v237 = vunpack.c.l.b16 %v62
    %v238 = vunpack.c.l.b16 %v63
    %v239 = vunpack.c.l.b16 %v64
    %v240 = vunpack.c.l.b16 %v65
    %v241 = vunpack.c.l.b16 %v66
    %v242 = vunpack.c.l.b16 %v67
    %v243 = vunpack.c.l.b16 %v68
    %v244 = vunpack.c.l.b16 %v69
    %v245 = vunpack.c.l.b16 %v70
    %v246 = vunpack.c.l.b16 %v71
    %v247 = vunpack.c.l.b16 %v72
    %v248 = vunpack.c.l.b16 %v73
    %v249 = vunpack.c.l.b16 %v74
    %v250 = vunpack.c.l.b16 %v75
    %v251 = vunpack.c.l.b16 %v76
    %v252 = vunpack.c.l.b16 %v77
    %v253 = vunpack.c.l.b16 %v78
    %v254 = vunpack.c.l.b16 %v79
    %v255 = vunpack.c.l.b16 %v80
    %v256 = vunpack.c.l.b16 %v81
    %v257 = vunpack.c.l.b16 %v82
    %v258 = vunpack.c.l.b16 %v83
    %v259 = vunpack.c.l.b16 %v84
    %v260 = vunpack.c.l.b16 %v85
    %v261 = vunpack.c.l.b16 %v86
    %v262 = vpack.c.b16 %v199, %v198
    %v263 = vpack.c.b16 %v201, %v200
    %v264 = vpack.c.b16 %v203, %v202
    %v265 = vpack.c.b16 %v205, %v204
    %v266 = vpack.c.b16 %v207, %v206
    %v267 = vpack.c.b16 %v209, %v208
    %v268 = vpack.c.b16 %v211, %v210
    %v269 = vpack.c.b16 %v213, %v212
    %v270 = vpack.c.b16 %v215, %v214
    %v271 = vpack.c.b16 %v217, %v216
    %v272 = vpack.c.b16 %v219, %v218
    %v273 = vpack.c.b16 %v221, %v220
    %v274 = vpack.c.b16 %v223, %v222
    %v275 = vpack.c.b16 %v225, %v224
    %v276 = vpack.c.b16 %v227, %v226
    %v277 = vpack.c.b16 %v229, %v228
    %v278 = vpack.c.b16 %v231, %v230
    %v279 = vpack.c.b16 %v233, %v232
    %v280 = vpack.c.b16 %v235, %v234
    %v281 = vpack.c.b16 %v237, %v236
    %v282 = vpack.c.b16 %v239, %v238
    %v283 = vpack.c.b16 %v241, %v240
    %v284 = vpack.c.b16 %v243, %v242
    %v285 = vpack.c.b16 %v245, %v244
    %v286 = vpack.c.b16 %v247, %v246
    %v287 = vpack.c.b16 %v249, %v248
    %v288 = vpack.c.b16 %v251, %v250
    %v289 = vpack.c.b16 %v253, %v252
    %v290 = vpack.c.b16 %v255, %v254
    %v291 = vpack.c.b16 %v257, %v256
    %v292 = vpack.c.b16 %v259, %v258
    %v293 = vpack.c.b16 %v261, %v260
    %326 = vmatprep.subr.bf16.mxu0 0
    %327 = vmatpush1.bf16.msra.mxu0 %v262
    %328 = vmatprep.subr.bf16.mxu0 0
    %329 = vmatpush1.bf16.msra.mxu0 %v263
    %330 = vmatprep.subr.bf16.mxu0 0
    %331 = vmatpush1.bf16.msra.mxu0 %v264
    %332 = vmatprep.subr.bf16.mxu0 0
    %333 = vmatpush1.bf16.msra.mxu0 %v265
    %334 = vmatprep.subr.bf16.mxu0 0
    %335 = vmatpush1.bf16.msra.mxu0 %v266
    %336 = vmatprep.subr.bf16.mxu0 0
    %337 = vmatpush1.bf16.msra.mxu0 %v267
    %338 = vmatprep.subr.bf16.mxu0 0
    %339 = vmatpush1.bf16.msra.mxu0 %v268
    %340 = vmatprep.subr.bf16.mxu0 0
    %341 = vmatpush1.bf16.msra.mxu0 %v269
    %342 = vmatprep.subr.bf16.mxu0 0
    %343 = vmatpush1.bf16.msra.mxu0 %v270
    %344 = vmatprep.subr.bf16.mxu0 0
    %345 = vmatpush1.bf16.msra.mxu0 %v271
    %346 = vmatprep.subr.bf16.mxu0 0
    %347 = vmatpush1.bf16.msra.mxu0 %v272
    %348 = vmatprep.subr.bf16.mxu0 0
    %349 = vmatpush1.bf16.msra.mxu0 %v273
    %350 = vmatprep.subr.bf16.mxu0 0
    %351 = vmatpush1.bf16.msra.mxu0 %v274
    %352 = vmatprep.subr.bf16.mxu0 0
    %353 = vmatpush1.bf16.msra.mxu0 %v275
    %354 = vmatprep.subr.bf16.mxu0 0
    %355 = vmatpush1.bf16.msra.mxu0 %v276
    %356 = vmatprep.subr.bf16.mxu0 0
    %357 = vmatpush1.bf16.msra.mxu0 %v277
    %358 = vmatprep.mubr.bf16.mxu0 %v119
    %359 = vmatmul.mubr.bf16.gmra.mrb[0].mxu0 %v118
    %v360 = vpop.f32.mrb[0].mxu0
    %v361 = vadd.f32 %v92, %v360
    %v362 = vpop.f32.mrb[0].mxu0
    %v363 = vpop.f32.mrb[0].mxu0
    %v364 = vadd.f32 %v92, %v363
    %v365 = vpop.f32.mrb[0].mxu0
    %366 = vmatprep.mubr.bf16.mxu0 %v123
    %367 = vmatmul.mubr.bf16.gmra.mrb[0].mxu0 %v122
    %v368 = vpop.f32.mrb[0].mxu0
    %v369 = vadd.f32 %v92, %v368
    %v370 = vpop.f32.mrb[0].mxu0
    %v371 = vpop.f32.mrb[0].mxu0
    %v372 = vadd.f32 %v92, %v371
    %v373 = vpop.f32.mrb[0].mxu0
    %374 = vdwg.mxu0
    %375 = vmatprep.subr.bf16.mxu0 0
    %376 = vmatpush1.bf16.msra.mxu0 %v278
    %377 = vmatprep.subr.bf16.mxu0 0
    %378 = vmatpush1.bf16.msra.mxu0 %v279
    %379 = vmatprep.subr.bf16.mxu0 0
    %380 = vmatpush1.bf16.msra.mxu0 %v280
    %381 = vmatprep.subr.bf16.mxu0 0
    %382 = vmatpush1.bf16.msra.mxu0 %v281
    %383 = vmatprep.subr.bf16.mxu0 0
    %384 = vmatpush1.bf16.msra.mxu0 %v282
    %385 = vmatprep.subr.bf16.mxu0 0
    %386 = vmatpush1.bf16.msra.mxu0 %v283
    %387 = vmatprep.subr.bf16.mxu0 0
    %388 = vmatpush1.bf16.msra.mxu0 %v284
    %389 = vmatprep.subr.bf16.mxu0 0
    %390 = vmatpush1.bf16.msra.mxu0 %v285
    %391 = vmatprep.subr.bf16.mxu0 0
    %392 = vmatpush1.bf16.msra.mxu0 %v286
    %393 = vmatprep.subr.bf16.mxu0 0
    %394 = vmatpush1.bf16.msra.mxu0 %v287
    %395 = vmatprep.subr.bf16.mxu0 0
    %396 = vmatpush1.bf16.msra.mxu0 %v288
    %397 = vmatprep.subr.bf16.mxu0 0
    %398 = vmatpush1.bf16.msra.mxu0 %v289
    %399 = vmatprep.subr.bf16.mxu0 0
    %400 = vmatpush1.bf16.msra.mxu0 %v290
    %401 = vmatprep.subr.bf16.mxu0 0
    %402 = vmatpush1.bf16.msra.mxu0 %v291
    %403 = vmatprep.subr.bf16.mxu0 0
    %404 = vmatpush1.bf16.msra.mxu0 %v292
    %405 = vmatprep.subr.bf16.mxu0 0
    %406 = vmatpush1.bf16.msra.mxu0 %v293
    %407 = vmatprep.mubr.bf16.mxu0 %v121
    %408 = vmatmul.mubr.bf16.gmra.mrb[0].mxu0 %v120
    %v409 = vpop.f32.mrb[0].mxu0
    %v410 = vadd.f32 %v361, %v409
    %v411 = vpop.f32.mrb[0].mxu0
    %v412 = vpop.f32.mrb[0].mxu0
    %v413 = vadd.f32 %v364, %v412
    %v414 = vpop.f32.mrb[0].mxu0
    %415 = vmatprep.mubr.bf16.mxu0 %v125
    %416 = vmatmul.mubr.bf16.gmra.mrb[0].mxu0 %v124
    %v417 = vpop.f32.mrb[0].mxu0
    %v418 = vadd.f32 %v369, %v417
    %v419 = vpop.f32.mrb[0].mxu0
    %v420 = vpop.f32.mrb[0].mxu0
    %v421 = vadd.f32 %v372, %v420
    %v422 = vpop.f32.mrb[0].mxu0
    %423 = vdwg.mxu0
    %v424 = vmul.f32 %v410, 0.01
    %v425 = vmul.f32 %v413, 0.01
    %v426 = vmul.f32 %v418, 0.01
    %v427 = vmul.f32 %v421, 0.01
    %v428 = vmax.f32 %v410, %v424
    %v429 = vmax.f32 %v413, %v425
    %v430 = vmax.f32 %v418, %v426
    %v431 = vmax.f32 %v421, %v427
    %v432 = vpack.c.bf16 %v429, %v428
    %v433 = vpack.c.bf16 %v431, %v430
    %v436 = vunpack.c.l.b16 %v432
    %v437 = vunpack.c.h.b16 %v432
    %v438 = vunpack.c.l.b16 %v433
    %v439 = vunpack.c.h.b16 %v433
    %v440 = vpack.c.b16 %v436, %v436
    %v441 = vpack.c.b16 %v437, %v437
    %v442 = vpack.c.b16 %v438, %v438
    %v443 = vpack.c.b16 %v439, %v439
    %448 = vst [vmem:[#allocation2] sm:$0xf] %v440
    %449 = vst [vmem:[#allocation2 + $0x4] sm:$0xf] %v441
    %450 = vst [vmem:[#allocation2 + $0x8] sm:$0xf] %v442
    %451 = vst [vmem:[#allocation2 + $0xc] sm:$0xf] %v443
    // Predicated region
    $region14: #{dqn_forward.4} parent=1 // pred_check
      _
    $region15: #{dqn_forward.4} parent=1 // pred_check_branch
      %453 = sbr.rel (0) target = $region17
    $region16: #{dqn_forward.4} parent=1 // pred_region
      // Predicated region
      $region18: #{dqn_forward.4} parent=16 // pred_check
        _
      $region19: #{dqn_forward.4} parent=16 // pred_check_branch
        %455 = sbr.rel (0) target = $region21
      $region20: #{dqn_forward.4} parent=16 // pred_region
        // Predicated region
        $region22: #{dqn_forward.4} parent=20 // pred_check
          _
        $region23: #{dqn_forward.4} parent=20 // pred_check_branch
          %457 = sbr.rel target = $region25
        $region24: #{dqn_forward.4} parent=20 // pred_region
          // Predicated region
          $region37: #{dqn_forward.4} parent=24 // pred_check
            _
          $region38: #{dqn_forward.4} parent=24 // pred_check_branch
            %476 = sbr.rel (0) target = $region40
          $region39: #{dqn_forward.4} parent=24 // pred_region
            loop: start=0, step=1, limit=1
            $region41: #{dqn_forward.4} parent=39 // loop_pre_header
              _
            $region42: #{dqn_forward.4} parent=39 // loop_header
              %s478 = sphi 0, %s482
              %p479 = scmp.ge.s32.totalorder %s478, 1
              %s483 = sphi [#allocation2], [#allocation2]
              %s484 = sphi %s3, %s3
            $region43: #{dqn_forward.4} parent=39 // loop_header_branch
              %481 = sbr.rel (%p479) target = $region47
            $region44: #{dqn_forward.4} parent=39 // loop_body
              _
            $region45: #{dqn_forward.4} parent=39 // loop_footer
              %s482 = sadd.s32 1, %s478
            $region46: #{dqn_forward.4} parent=39 // loop_footer_branch
              %477 = sbr.rel target = $region42
            $region47: #{dqn_forward.4} parent=39 // loop_exit
              _
            loop: start=0, step=1, limit=1
            $region48: #{dqn_forward.4} parent=39 // loop_pre_header
              _
            $region49: #{dqn_forward.4} parent=39 // loop_header
              %s487 = sphi 0, %s491
              %p488 = scmp.ge.s32.totalorder %s487, 1
              %s492 = sphi [#allocation2], [#allocation2]
              %s493 = sphi %s3, %s3
            $region50: #{dqn_forward.4} parent=39 // loop_header_branch
              %490 = sbr.rel (%p488) target = $region54
            $region51: #{dqn_forward.4} parent=39 // loop_body
              %v494 = vld [vmem:[%s492] sm:$0xf]
              %495 = vst [vmem:[%s493] sm:$0xf] %v494
              %v496 = vld [vmem:[%s492 + $0x4] sm:$0xf]
              %497 = vst [vmem:[%s493 + $0x4] sm:$0xf] %v496
              %v498 = vld [vmem:[%s492 + $0x8] sm:$0xf]
              %499 = vst [vmem:[%s493 + $0x8] sm:$0xf] %v498
            $region52: #{dqn_forward.4} parent=39 // loop_footer
              %s491 = sadd.s32 1, %s487
            $region53: #{dqn_forward.4} parent=39 // loop_footer_branch
              %486 = sbr.rel target = $region49
            $region54: #{dqn_forward.4} parent=39 // loop_exit
              _
          $region40: #{dqn_forward.4} parent=24 // pred_fallthru
            _
        $region25: #{dqn_forward.4} parent=20 // pred_fallthru
          _
        // Predicated region
        $region26: #{dqn_forward.4} parent=20 // pred_check
          _
        $region27: #{dqn_forward.4} parent=20 // pred_check_branch
          %459 = sbr.rel (0) target = $region29
        $region28: #{dqn_forward.4} parent=20 // pred_region
          loop: start=0, step=1, limit=1
          $region30: #{dqn_forward.4} parent=28 // loop_pre_header
            _
          $region31: #{dqn_forward.4} parent=28 // loop_header
            %s462 = sphi 0, %s466
            %p463 = scmp.ge.s32.totalorder %s462, 1
            %s467 = sphi [#allocation2], [#allocation2]
            %s468 = sphi %s3, %s3
          $region32: #{dqn_forward.4} parent=28 // loop_header_branch
            %465 = sbr.rel (%p463) target = $region36
          $region33: #{dqn_forward.4} parent=28 // loop_body
            %v469 = vld [vmem:[%s467] sm:$0xf]
            %470 = vst [vmem:[%s468] sm:$0xf] %v469
            %v471 = vld [vmem:[%s467 + $0x4] sm:$0xf]
            %472 = vst [vmem:[%s468 + $0x4] sm:$0xf] %v471
            %v473 = vld [vmem:[%s467 + $0x8] sm:$0xf]
            %474 = vst [vmem:[%s468 + $0x8] sm:$0xf] %v473
          $region34: #{dqn_forward.4} parent=28 // loop_footer
            %s466 = sadd.s32 1, %s462
          $region35: #{dqn_forward.4} parent=28 // loop_footer_branch
            %461 = sbr.rel target = $region31
          $region36: #{dqn_forward.4} parent=28 // loop_exit
            _
        $region29: #{dqn_forward.4} parent=20 // pred_fallthru
          _
      $region21: #{dqn_forward.4} parent=16 // pred_fallthru
        _
      %500 = vnop
    $region17: #{dqn_forward.4} parent=1 // pred_fallthru
      _
    // Predicated region
    $region55: #{dqn_forward.4} parent=1 // pred_check
      _
    $region56: #{dqn_forward.4} parent=1 // pred_check_branch
      %502 = sbr.rel (0) target = $region58
    $region57: #{dqn_forward.4} parent=1 // pred_region
      _
    $region58: #{dqn_forward.4} parent=1 // pred_fallthru
      _

// kernel: dqn_forward.5
$region0: #{dqn_forward.5}
  #allocation0 [shape = 'u32[]', space=smem, size = 0x4, offset = 0x4, fixed_abs, tag = 'smem constant byte address 0x4 - core index']
  #allocation1 [shape = 'u32[144,128]{1,0:T(1,128)}', space=vmem, size = 0x12000, scoped, tag = 'internal scratch']
  %s0 = inlined_call_operand.vmem [shape: bf16[2,576], index: 0, kind: input, shape index: {}]
  %s1 = inlined_call_operand.vmem [shape: bf16[576,128], index: 1, kind: input, shape index: {}]
  %s2 = inlined_call_operand.vmem [shape: f32[1,128], index: 2, kind: input, shape index: {}]
  %s3 = inlined_call_operand.vmem [shape: bf16[128,128], index: 3, kind: input, shape index: {}]
  %s4 = inlined_call_operand.vmem [shape: f32[1,128], index: 4, kind: input, shape index: {}]
  %s5 = inlined_call_operand.vmem [shape: bf16[128,128], index: 5, kind: input, shape index: {}]
  %s6 = inlined_call_operand.vmem [shape: f32[1,128], index: 6, kind: input, shape index: {}]
  %s7 = inlined_call_operand.vmem [shape: bf16[128,128], index: 7, kind: input, shape index: {}]
  %s8 = inlined_call_operand.vmem [shape: f32[1,128], index: 8, kind: input, shape index: {}]
  %s9 = inlined_call_operand.hbm [shape: f32[2,128], index: 9, kind: output, shape index: {}]
  %s10 = sld [smem:[#allocation0]]
  $region46: #{dqn_forward.5} parent=0
    _
  %s12 = ssub.s32 1, %s10
  %s13 = scalar_select 0, %s12, %s10
  $region1: #{dqn_forward.5} parent=0
    #allocation2 [shape = 'u8[8192]{0}', space=vmem, size = 0x2000, scoped, tag = 'output window, operand 0, single buffered']
    #allocation3 [shape = 's32[1]{0}', space=sflag, size = 0x4, scoped, tag = 'scoped memory for dqn_forward.5']
    %14 = vsyncpa [#allocation3], 0
    // Predicated region
    $region2: #{dqn_forward.5} parent=1 // pred_check
      _
    $region3: #{dqn_forward.5} parent=1 // pred_check_branch
      %16 = sbr.rel (0) target = $region5
    $region4: #{dqn_forward.5} parent=1 // pred_region
      _
    $region5: #{dqn_forward.5} parent=1 // pred_fallthru
      _
    // Predicated region
    $region6: #{dqn_forward.5} parent=1 // pred_check
      _
    $region7: #{dqn_forward.5} parent=1 // pred_check_branch
      %18 = sbr.rel (0) target = $region9
    $region8: #{dqn_forward.5} parent=1 // pred_region
      _
    $region9: #{dqn_forward.5} parent=1 // pred_fallthru
      _
    // Predicated region
    $region10: #{dqn_forward.5} parent=1 // pred_check
      _
    $region11: #{dqn_forward.5} parent=1 // pred_check_branch
      %20 = sbr.rel (0) target = $region13
    $region12: #{dqn_forward.5} parent=1 // pred_region
      _
    $region13: #{dqn_forward.5} parent=1 // pred_fallthru
      _
    // Predicated region
    $region14: #{dqn_forward.5} parent=1 // pred_check
      _
    $region15: #{dqn_forward.5} parent=1 // pred_check_branch
      %22 = sbr.rel (0) target = $region17
    $region16: #{dqn_forward.5} parent=1 // pred_region
      _
    $region17: #{dqn_forward.5} parent=1 // pred_fallthru
      _
    // Predicated region
    $region18: #{dqn_forward.5} parent=1 // pred_check
      _
    $region19: #{dqn_forward.5} parent=1 // pred_check_branch
      %24 = sbr.rel (0) target = $region21
    $region20: #{dqn_forward.5} parent=1 // pred_region
      _
    $region21: #{dqn_forward.5} parent=1 // pred_fallthru
      _
    // Predicated region
    $region22: #{dqn_forward.5} parent=1 // pred_check
      _
    $region23: #{dqn_forward.5} parent=1 // pred_check_branch
      %26 = sbr.rel (0) target = $region25
    $region24: #{dqn_forward.5} parent=1 // pred_region
      _
    $region25: #{dqn_forward.5} parent=1 // pred_fallthru
      _
    // Predicated region
    $region26: #{dqn_forward.5} parent=1 // pred_check
      _
    $region27: #{dqn_forward.5} parent=1 // pred_check_branch
      %28 = sbr.rel (0) target = $region29
    $region28: #{dqn_forward.5} parent=1 // pred_region
      _
    $region29: #{dqn_forward.5} parent=1 // pred_fallthru
      _
    // Predicated region
    $region30: #{dqn_forward.5} parent=1 // pred_check
      _
    $region31: #{dqn_forward.5} parent=1 // pred_check_branch
      %30 = sbr.rel (0) target = $region33
    $region32: #{dqn_forward.5} parent=1 // pred_region
      _
    $region33: #{dqn_forward.5} parent=1 // pred_fallthru
      _
    // Predicated region
    $region34: #{dqn_forward.5} parent=1 // pred_check
      _
    $region35: #{dqn_forward.5} parent=1 // pred_check_branch
      %32 = sbr.rel (0) target = $region37
    $region36: #{dqn_forward.5} parent=1 // pred_region
      _
    $region37: #{dqn_forward.5} parent=1 // pred_fallthru
      _
    %v34 = vld [vmem:[%s0] sm:$0x1f]
    %v35 = vld [vmem:[%s0 + $0x5] sm:$0x1f]
    %v36 = vld [vmem:[%s0 + $0xa] sm:$0x1f]
    %v37 = vld [vmem:[%s0 + $0xf] sm:$0x1f]
    %v38 = vld [vmem:[%s0 + $0x14] sm:$0x1f]
    %v39 = vld [vmem:[%s0 + $0x19] sm:$0x1f]
    %v40 = vld [vmem:[%s0 + $0x1e] sm:$0x1f]
    %v41 = vld [vmem:[%s0 + $0x23] sm:$0x1f]
    %v42 = vld [vmem:[%s1] sm:$0xf]
    %v43 = vld [vmem:[%s1 + $0x4] sm:$0xf]
    %v44 = vld [vmem:[%s1 + $0x8] sm:$0xf]
    %v45 = vld [vmem:[%s1 + $0xc] sm:$0xf]
    %v46 = vld [vmem:[%s1 + $0x10] sm:$0xf]
    %v47 = vld [vmem:[%s1 + $0x14] sm:$0xf]
    %v48 = vld [vmem:[%s1 + $0x18] sm:$0xf]
    %v49 = vld [vmem:[%s1 + $0x1c] sm:$0xf]
    %v50 = vld [vmem:[%s1 + $0x20] sm:$0xf]
    %v51 = vld [vmem:[%s1 + $0x24] sm:$0xf]
    %v52 = vld [vmem:[%s1 + $0x28] sm:$0xf]
    %v53 = vld [vmem:[%s1 + $0x2c] sm:$0xf]
    %v54 = vld [vmem:[%s1 + $0x30] sm:$0xf]
    %v55 = vld [vmem:[%s1 + $0x34] sm:$0xf]
    %v56 = vld [vmem:[%s1 + $0x38] sm:$0xf]
    %v57 = vld [vmem:[%s1 + $0x3c] sm:$0xf]
    %v58 = vld [vmem:[%s1 + $0x40] sm:$0xf]
    %v59 = vld [vmem:[%s1 + $0x44] sm:$0xf]
    %v60 = vld [vmem:[%s1 + $0x48] sm:$0xf]
    %v61 = vld [vmem:[%s1 + $0x4c] sm:$0xf]
    %v62 = vld [vmem:[%s1 + $0x50] sm:$0xf]
    %v63 = vld [vmem:[%s1 + $0x54] sm:$0xf]
    %v64 = vld [vmem:[%s1 + $0x58] sm:$0xf]
    %v65 = vld [vmem:[%s1 + $0x5c] sm:$0xf]
    %v66 = vld [vmem:[%s1 + $0x60] sm:$0xf]
    %v67 = vld [vmem:[%s1 + $0x64] sm:$0xf]
    %v68 = vld [vmem:[%s1 + $0x68] sm:$0xf]
    %v69 = vld [vmem:[%s1 + $0x6c] sm:$0xf]
    %v70 = vld [vmem:[%s1 + $0x70] sm:$0xf]
    %v71 = vld [vmem:[%s1 + $0x74] sm:$0xf]
    %v72 = vld [vmem:[%s1 + $0x78] sm:$0xf]
    %v73 = vld [vmem:[%s1 + $0x7c] sm:$0xf]
    %v74 = vld [vmem:[%s1 + $0x80] sm:$0xf]
    %v75 = vld [vmem:[%s1 + $0x84] sm:$0xf]
    %v76 = vld [vmem:[%s1 + $0x88] sm:$0xf]
    %v77 = vld [vmem:[%s1 + $0x8c] sm:$0xf]
    %v78 = vld [vmem:[%s1 + $0x90] sm:$0xf]
    %v79 = vld [vmem:[%s1 + $0x94] sm:$0xf]
    %v80 = vld [vmem:[%s1 + $0x98] sm:$0xf]
    %v81 = vld [vmem:[%s1 + $0x9c] sm:$0xf]
    %v82 = vld [vmem:[%s1 + $0xa0] sm:$0xf]
    %v83 = vld [vmem:[%s1 + $0xa4] sm:$0xf]
    %v84 = vld [vmem:[%s1 + $0xa8] sm:$0xf]
    %v85 = vld [vmem:[%s1 + $0xac] sm:$0xf]
    %v86 = vld [vmem:[%s1 + $0xb0] sm:$0xf]
    %v87 = vld [vmem:[%s1 + $0xb4] sm:$0xf]
    %v88 = vld [vmem:[%s1 + $0xb8] sm:$0xf]
    %v89 = vld [vmem:[%s1 + $0xbc] sm:$0xf]
    %v90 = vld [vmem:[%s1 + $0xc0] sm:$0xf]
    %v91 = vld [vmem:[%s1 + $0xc4] sm:$0xf]
    %v92 = vld [vmem:[%s1 + $0xc8] sm:$0xf]
    %v93 = vld [vmem:[%s1 + $0xcc] sm:$0xf]
    %v94 = vld [vmem:[%s1 + $0xd0] sm:$0xf]
    %v95 = vld [vmem:[%s1 + $0xd4] sm:$0xf]
    %v96 = vld [vmem:[%s1 + $0xd8] sm:$0xf]
    %v97 = vld [vmem:[%s1 + $0xdc] sm:$0xf]
    %v98 = vld [vmem:[%s1 + $0xe0] sm:$0xf]
    %v99 = vld [vmem:[%s1 + $0xe4] sm:$0xf]
    %v100 = vld [vmem:[%s1 + $0xe8] sm:$0xf]
    %v101 = vld [vmem:[%s1 + $0xec] sm:$0xf]
    %v102 = vld [vmem:[%s1 + $0xf0] sm:$0xf]
    %v103 = vld [vmem:[%s1 + $0xf4] sm:$0xf]
    %v104 = vld [vmem:[%s1 + $0xf8] sm:$0xf]
    %v105 = vld [vmem:[%s1 + $0xfc] sm:$0xf]
    %v106 = vld [vmem:[%s1 + $0x100] sm:$0xf]
    %v107 = vld [vmem:[%s1 + $0x104] sm:$0xf]
    %v108 = vld [vmem:[%s1 + $0x108] sm:$0xf]
    %v109 = vld [vmem:[%s1 + $0x10c] sm:$0xf]
    %v110 = vld [vmem:[%s1 + $0x110] sm:$0xf]
    %v111 = vld [vmem:[%s1 + $0x114] sm:$0xf]
    %v112 = vld [vmem:[%s1 + $0x118] sm:$0xf]
    %v113 = vld [vmem:[%s1 + $0x11c] sm:$0xf]
    %v114 = vld [vmem:[%s2] sm:$0x1]
    %v116 = vlaneseq
    %v117 = vshrl.u32 %v116, 7
    %v118 = vsub.s32 0, %v117
    %v119 = vrot.slane %v114, %v118
    %v129 = vcombine.low %v34, %v35
    %v130 = vcombine.high %v34, %v35
    %v131 = vcombine.low %v36, %v37
    %v132 = vcombine.high %v36, %v37
    %v133 = vcombine.low %v38, %v39
    %v134 = vcombine.high %v38, %v39
    %v135 = vcombine.low %v40, %v41
    %v136 = vcombine.high %v40, %v41
    %v138 = vunpack.c.l.s4 1966171168
    %v139 = vunpack.c.0.s8 %v138
    %v140 = vlaneseq
    %v141 = vshrl.u32 %v140, 7
    %v142 = vsub.s32 %v139, %v141
    %v143 = vrot.slane %v129, %v142
    %v145 = vunpack.c.l.s4 1966171168
    %v146 = vunpack.c.0.s8 %v145
    %v147 = vlaneseq
    %v148 = vshrl.u32 %v147, 7
    %v149 = vsub.s32 %v146, %v148
    %v150 = vrot.slane %v130, %v149
    %v152 = vunpack.c.l.s4 1966171168
    %v153 = vunpack.c.0.s8 %v152
    %v154 = vlaneseq
    %v155 = vshrl.u32 %v154, 7
    %v156 = vsub.s32 %v153, %v155
    %v157 = vrot.slane %v131, %v156
    %v159 = vunpack.c.l.s4 1966171168
    %v160 = vunpack.c.0.s8 %v159
    %v161 = vlaneseq
    %v162 = vshrl.u32 %v161, 7
    %v163 = vsub.s32 %v160, %v162
    %v164 = vrot.slane %v132, %v163
    %v166 = vunpack.c.l.s4 1966171168
    %v167 = vunpack.c.0.s8 %v166
    %v168 = vlaneseq
    %v169 = vshrl.u32 %v168, 7
    %v170 = vsub.s32 %v167, %v169
    %v171 = vrot.slane %v133, %v170
    %v173 = vunpack.c.l.s4 1966171168
    %v174 = vunpack.c.0.s8 %v173
    %v175 = vlaneseq
    %v176 = vshrl.u32 %v175, 7
    %v177 = vsub.s32 %v174, %v176
    %v178 = vrot.slane %v134, %v177
    %v180 = vunpack.c.l.s4 1966171168
    %v181 = vunpack.c.0.s8 %v180
    %v182 = vlaneseq
    %v183 = vshrl.u32 %v182, 7
    %v184 = vsub.s32 %v181, %v183
    %v185 = vrot.slane %v135, %v184
    %v187 = vunpack.c.l.s4 1966171168
    %v188 = vunpack.c.0.s8 %v187
    %v189 = vlaneseq
    %v190 = vshrl.u32 %v189, 7
    %v191 = vsub.s32 %v188, %v190
    %v192 = vrot.slane %v136, %v191
    %v193 = vcombine.low %v143, %v157
    %v194 = vcombine.high %v143, %v157
    %v195 = vcombine.low %v150, %v164
    %v196 = vcombine.low %v171, %v185
    %v197 = vcombine.high %v171, %v185
    %v198 = vcombine.low %v178, %v192
    %v200 = vunpack.c.l.s4 1966171168
    %v201 = vunpack.c.0.s8 %v200
    %v202 = vlaneseq
    %v203 = vshrl.u32 %v202, 7
    %v204 = vsub.s32 %v201, %v203
    %v205 = vrot.slane %v193, %v204
    %v207 = vunpack.c.l.s4 1966171168
    %v208 = vunpack.c.0.s8 %v207
    %v209 = vlaneseq
    %v210 = vshrl.u32 %v209, 7
    %v211 = vsub.s32 %v208, %v210
    %v212 = vrot.slane %v195, %v211
    %v214 = vunpack.c.l.s4 1966171168
    %v215 = vunpack.c.0.s8 %v214
    %v216 = vlaneseq
    %v217 = vshrl.u32 %v216, 7
    %v218 = vsub.s32 %v215, %v217
    %v219 = vrot.slane %v194, %v218
    %v221 = vunpack.c.l.s4 1966171168
    %v222 = vunpack.c.0.s8 %v221
    %v223 = vlaneseq
    %v224 = vshrl.u32 %v223, 7
    %v225 = vsub.s32 %v222, %v224
    %v226 = vrot.slane %v196, %v225
    %v228 = vunpack.c.l.s4 1966171168
    %v229 = vunpack.c.0.s8 %v228
    %v230 = vlaneseq
    %v231 = vshrl.u32 %v230, 7
    %v232 = vsub.s32 %v229, %v231
    %v233 = vrot.slane %v198, %v232
    %v235 = vunpack.c.l.s4 1966171168
    %v236 = vunpack.c.0.s8 %v235
    %v237 = vlaneseq
    %v238 = vshrl.u32 %v237, 7
    %v239 = vsub.s32 %v236, %v238
    %v240 = vrot.slane %v197, %v239
    %v241 = vcombine.low %v205, %v226
    %v242 = vcombine.high %v205, %v226
    %v243 = vcombine.low %v212, %v233
    %v244 = vcombine.low %v219, %v240
    %v245 = vcombine.high %v219, %v240
    %v322 = vunpack.c.l.b16 %v42
    %v323 = vunpack.c.l.b16 %v43
    %v324 = vunpack.c.l.b16 %v44
    %v325 = vunpack.c.l.b16 %v45
    %v326 = vunpack.c.l.b16 %v46
    %v327 = vunpack.c.l.b16 %v47
    %v328 = vunpack.c.l.b16 %v48
    %v329 = vunpack.c.l.b16 %v49
    %v330 = vunpack.c.l.b16 %v50
    %v331 = vunpack.c.l.b16 %v51
    %v332 = vunpack.c.l.b16 %v52
    %v333 = vunpack.c.l.b16 %v53
    %v334 = vunpack.c.l.b16 %v54
    %v335 = vunpack.c.l.b16 %v55
    %v336 = vunpack.c.l.b16 %v56
    %v337 = vunpack.c.l.b16 %v57
    %v338 = vunpack.c.l.b16 %v58
    %v339 = vunpack.c.l.b16 %v59
    %v340 = vunpack.c.l.b16 %v60
    %v341 = vunpack.c.l.b16 %v61
    %v342 = vunpack.c.l.b16 %v62
    %v343 = vunpack.c.l.b16 %v63
    %v344 = vunpack.c.l.b16 %v64
    %v345 = vunpack.c.l.b16 %v65
    %v346 = vunpack.c.l.b16 %v66
    %v347 = vunpack.c.l.b16 %v67
    %v348 = vunpack.c.l.b16 %v68
    %v349 = vunpack.c.l.b16 %v69
    %v350 = vunpack.c.l.b16 %v70
    %v351 = vunpack.c.l.b16 %v71
    %v352 = vunpack.c.l.b16 %v72
    %v353 = vunpack.c.l.b16 %v73
    %v354 = vunpack.c.l.b16 %v74
    %v355 = vunpack.c.l.b16 %v75
    %v356 = vunpack.c.l.b16 %v76
    %v357 = vunpack.c.l.b16 %v77
    %v358 = vunpack.c.l.b16 %v78
    %v359 = vunpack.c.l.b16 %v79
    %v360 = vunpack.c.l.b16 %v80
    %v361 = vunpack.c.l.b16 %v81
    %v362 = vunpack.c.l.b16 %v82
    %v363 = vunpack.c.l.b16 %v83
    %v364 = vunpack.c.l.b16 %v84
    %v365 = vunpack.c.l.b16 %v85
    %v366 = vunpack.c.l.b16 %v86
    %v367 = vunpack.c.l.b16 %v87
    %v368 = vunpack.c.l.b16 %v88
    %v369 = vunpack.c.l.b16 %v89
    %v370 = vunpack.c.l.b16 %v90
    %v371 = vunpack.c.l.b16 %v91
    %v372 = vunpack.c.l.b16 %v92
    %v373 = vunpack.c.l.b16 %v93
    %v374 = vunpack.c.l.b16 %v94
    %v375 = vunpack.c.l.b16 %v95
    %v376 = vunpack.c.l.b16 %v96
    %v377 = vunpack.c.l.b16 %v97
    %v378 = vunpack.c.l.b16 %v98
    %v379 = vunpack.c.l.b16 %v99
    %v380 = vunpack.c.l.b16 %v100
    %v381 = vunpack.c.l.b16 %v101
    %v382 = vunpack.c.l.b16 %v102
    %v383 = vunpack.c.l.b16 %v103
    %v384 = vunpack.c.l.b16 %v104
    %v385 = vunpack.c.l.b16 %v105
    %v386 = vunpack.c.l.b16 %v106
    %v387 = vunpack.c.l.b16 %v107
    %v388 = vunpack.c.l.b16 %v108
    %v389 = vunpack.c.l.b16 %v109
    %v390 = vunpack.c.l.b16 %v110
    %v391 = vunpack.c.l.b16 %v111
    %v392 = vunpack.c.l.b16 %v112
    %v393 = vunpack.c.l.b16 %v113
    %v394 = vpack.c.b16 %v323, %v322
    %v395 = vpack.c.b16 %v325, %v324
    %v396 = vpack.c.b16 %v327, %v326
    %v397 = vpack.c.b16 %v329, %v328
    %v398 = vpack.c.b16 %v331, %v330
    %v399 = vpack.c.b16 %v333, %v332
    %v400 = vpack.c.b16 %v335, %v334
    %v401 = vpack.c.b16 %v337, %v336
    %v402 = vpack.c.b16 %v339, %v338
    %v403 = vpack.c.b16 %v341, %v340
    %v404 = vpack.c.b16 %v343, %v342
    %v405 = vpack.c.b16 %v345, %v344
    %v406 = vpack.c.b16 %v347, %v346
    %v407 = vpack.c.b16 %v349, %v348
    %v408 = vpack.c.b16 %v351, %v350
    %v409 = vpack.c.b16 %v353, %v352
    %v410 = vpack.c.b16 %v355, %v354
    %v411 = vpack.c.b16 %v357, %v356
    %v412 = vpack.c.b16 %v359, %v358
    %v413 = vpack.c.b16 %v361, %v360
    %v414 = vpack.c.b16 %v363, %v362
    %v415 = vpack.c.b16 %v365, %v364
    %v416 = vpack.c.b16 %v367, %v366
    %v417 = vpack.c.b16 %v369, %v368
    %v418 = vpack.c.b16 %v371, %v370
    %v419 = vpack.c.b16 %v373, %v372
    %v420 = vpack.c.b16 %v375, %v374
    %v421 = vpack.c.b16 %v377, %v376
    %v422 = vpack.c.b16 %v379, %v378
    %v423 = vpack.c.b16 %v381, %v380
    %v424 = vpack.c.b16 %v383, %v382
    %v425 = vpack.c.b16 %v385, %v384
    %v426 = vpack.c.b16 %v387, %v386
    %v427 = vpack.c.b16 %v389, %v388
    %v428 = vpack.c.b16 %v391, %v390
    %v429 = vpack.c.b16 %v393, %v392
    %vm466 = vcmask 523264
    %v468 = vsel %vm466, %v243, 0
    %470 = vmatprep.subr.bf16.mxu0 0
    %471 = vmatpush1.bf16.msra.mxu0 %v394
    %472 = vmatprep.subr.bf16.mxu0 0
    %473 = vmatpush1.bf16.msra.mxu0 %v395
    %474 = vmatprep.subr.bf16.mxu0 0
    %475 = vmatpush1.bf16.msra.mxu0 %v396
    %476 = vmatprep.subr.bf16.mxu0 0
    %477 = vmatpush1.bf16.msra.mxu0 %v397
    %478 = vmatprep.subr.bf16.mxu0 0
    %479 = vmatpush1.bf16.msra.mxu0 %v398
    %480 = vmatprep.subr.bf16.mxu0 0
    %481 = vmatpush1.bf16.msra.mxu0 %v399
    %482 = vmatprep.subr.bf16.mxu0 0
    %483 = vmatpush1.bf16.msra.mxu0 %v400
    %484 = vmatprep.subr.bf16.mxu0 0
    %485 = vmatpush1.bf16.msra.mxu0 %v401
    %486 = vmatprep.subr.bf16.mxu0 0
    %487 = vmatpush1.bf16.msra.mxu0 %v402
    %488 = vmatprep.subr.bf16.mxu0 0
    %489 = vmatpush1.bf16.msra.mxu0 %v403
    %490 = vmatprep.subr.bf16.mxu0 0
    %491 = vmatpush1.bf16.msra.mxu0 %v404
    %492 = vmatprep.subr.bf16.mxu0 0
    %493 = vmatpush1.bf16.msra.mxu0 %v405
    %494 = vmatprep.subr.bf16.mxu0 0
    %495 = vmatpush1.bf16.msra.mxu0 %v406
    %496 = vmatprep.subr.bf16.mxu0 0
    %497 = vmatpush1.bf16.msra.mxu0 %v407
    %498 = vmatprep.subr.bf16.mxu0 0
    %499 = vmatpush1.bf16.msra.mxu0 %v408
    %500 = vmatprep.subr.bf16.mxu0 0
    %501 = vmatpush1.bf16.msra.mxu0 %v409
    %502 = vmatprep.mubr.bf16.mxu0 %v244
    %503 = vmatmul.mubr.bf16.gmra.mrb[0].mxu0 %v241
    %v504 = vpop.f32.mrb[0].mxu0
    %v505 = vadd.f32 %v119, %v504
    %v506 = vpop.f32.mrb[0].mxu0
    %v507 = vpop.f32.mrb[0].mxu0
    %v508 = vadd.f32 %v119, %v507
    %v509 = vpop.f32.mrb[0].mxu0
    %510 = vdwg.mxu0
    %511 = vmatprep.subr.bf16.mxu0 0
    %512 = vmatpush1.bf16.msra.mxu0 %v410
    %513 = vmatprep.subr.bf16.mxu0 0
    %514 = vmatpush1.bf16.msra.mxu0 %v411
    %515 = vmatprep.subr.bf16.mxu0 0
    %516 = vmatpush1.bf16.msra.mxu0 %v412
    %517 = vmatprep.subr.bf16.mxu0 0
    %518 = vmatpush1.bf16.msra.mxu0 %v413
    %519 = vmatprep.subr.bf16.mxu0 0
    %520 = vmatpush1.bf16.msra.mxu0 %v414
    %521 = vmatprep.subr.bf16.mxu0 0
    %522 = vmatpush1.bf16.msra.mxu0 %v415
    %523 = vmatprep.subr.bf16.mxu0 0
    %524 = vmatpush1.bf16.msra.mxu0 %v416
    %525 = vmatprep.subr.bf16.mxu0 0
    %526 = vmatpush1.bf16.msra.mxu0 %v417
    %527 = vmatprep.subr.bf16.mxu0 0
    %528 = vmatpush1.bf16.msra.mxu0 %v418
    %529 = vmatprep.subr.bf16.mxu0 0
    %530 = vmatpush1.bf16.msra.mxu0 %v419
    %531 = vmatprep.subr.bf16.mxu0 0
    %532 = vmatpush1.bf16.msra.mxu0 %v420
    %533 = vmatprep.subr.bf16.mxu0 0
    %534 = vmatpush1.bf16.msra.mxu0 %v421
    %535 = vmatprep.subr.bf16.mxu0 0
    %536 = vmatpush1.bf16.msra.mxu0 %v422
    %537 = vmatprep.subr.bf16.mxu0 0
    %538 = vmatpush1.bf16.msra.mxu0 %v423
    %539 = vmatprep.subr.bf16.mxu0 0
    %540 = vmatpush1.bf16.msra.mxu0 %v424
    %541 = vmatprep.subr.bf16.mxu0 0
    %542 = vmatpush1.bf16.msra.mxu0 %v425
    %543 = vmatprep.mubr.bf16.mxu0 %v245
    %544 = vmatmul.mubr.bf16.gmra.mrb[0].mxu0 %v242
    %v545 = vpop.f32.mrb[0].mxu0
    %v546 = vadd.f32 %v505, %v545
    %v547 = vpop.f32.mrb[0].mxu0
    %v548 = vpop.f32.mrb[0].mxu0
    %v549 = vadd.f32 %v508, %v548
    %v550 = vpop.f32.mrb[0].mxu0
    %551 = vdwg.mxu0
    %552 = vmatprep.subr.bf16.mxu0 0
    %553 = vmatpush1.bf16.msra.mxu0 %v426
    %554 = vmatprep.subr.bf16.mxu0 0
    %555 = vmatpush1.bf16.msra.mxu0 %v427
    %556 = vmatprep.subr.bf16.mxu0 0
    %557 = vmatpush1.bf16.msra.mxu0 %v428
    %558 = vmatprep.subr.bf16.mxu0 0
    %559 = vmatpush1.bf16.msra.mxu0 %v429
    %560 = vmatprep.subr.bf16.mxu0 0
    %561 = vmatpush1.bf16.msra.mxu0 0
    %562 = vmatprep.subr.bf16.mxu0 0
    %563 = vmatpush1.bf16.msra.mxu0 0
    %564 = vmatprep.subr.bf16.mxu0 0
    %565 = vmatpush1.bf16.msra.mxu0 0
    %566 = vmatprep.subr.bf16.mxu0 0
    %567 = vmatpush1.bf16.msra.mxu0 0
    %568 = vmatprep.subr.bf16.mxu0 0
    %569 = vmatpush1.bf16.msra.mxu0 0
    %570 = vmatprep.subr.bf16.mxu0 0
    %571 = vmatpush1.bf16.msra.mxu0 0
    %572 = vmatprep.subr.bf16.mxu0 0
    %573 = vmatpush1.bf16.msra.mxu0 0
    %574 = vmatprep.subr.bf16.mxu0 0
    %575 = vmatpush1.bf16.msra.mxu0 0
    %576 = vmatprep.subr.bf16.mxu0 0
    %577 = vmatpush1.bf16.msra.mxu0 0
    %578 = vmatprep.subr.bf16.mxu0 0
    %579 = vmatpush1.bf16.msra.mxu0 0
    %580 = vmatprep.subr.bf16.mxu0 0
    %581 = vmatpush1.bf16.msra.mxu0 0
    %582 = vmatprep.subr.bf16.mxu0 0
    %583 = vmatpush1.bf16.msra.mxu0 0
    %584 = vmatprep.mubr.bf16.mxu0 0
    %585 = vmatmul.mubr.bf16.gmra.mrb[0].mxu0 %v468
    %v586 = vpop.f32.mrb[0].mxu0
    %v587 = vadd.f32 %v546, %v586
    %v588 = vpop.f32.mrb[0].mxu0
    %v589 = vpop.f32.mrb[0].mxu0
    %v590 = vadd.f32 %v549, %v589
    %v591 = vpop.f32.mrb[0].mxu0
    %592 = vdwg.mxu0
    %v593 = vmul.f32 %v587, 0.01
    %v594 = vmul.f32 %v590, 0.01
    %v595 = vmax.f32 %v587, %v593
    %v596 = vmax.f32 %v590, %v594
    %v597 = vpack.c.bf16 %v596, %v595
    %v598 = vld [vmem:[%s3] sm:$0xf]
    %v599 = vld [vmem:[%s3 + $0x4] sm:$0xf]
    %v600 = vld [vmem:[%s3 + $0x8] sm:$0xf]
    %v601 = vld [vmem:[%s3 + $0xc] sm:$0xf]
    %v602 = vld [vmem:[%s3 + $0x10] sm:$0xf]
    %v603 = vld [vmem:[%s3 + $0x14] sm:$0xf]
    %v604 = vld [vmem:[%s3 + $0x18] sm:$0xf]
    %v605 = vld [vmem:[%s3 + $0x1c] sm:$0xf]
    %v606 = vld [vmem:[%s3 + $0x20] sm:$0xf]
    %v607 = vld [vmem:[%s3 + $0x24] sm:$0xf]
    %v608 = vld [vmem:[%s3 + $0x28] sm:$0xf]
    %v609 = vld [vmem:[%s3 + $0x2c] sm:$0xf]
    %v610 = vld [vmem:[%s3 + $0x30] sm:$0xf]
    %v611 = vld [vmem:[%s3 + $0x34] sm:$0xf]
    %v612 = vld [vmem:[%s3 + $0x38] sm:$0xf]
    %v613 = vld [vmem:[%s3 + $0x3c] sm:$0xf]
    %v614 = vld [vmem:[%s4] sm:$0x1]
    %v616 = vlaneseq
    %v617 = vshrl.u32 %v616, 7
    %v618 = vsub.s32 0, %v617
    %v619 = vrot.slane %v614, %v618
    %v637 = vunpack.c.l.b16 %v598
    %v638 = vunpack.c.l.b16 %v599
    %v639 = vunpack.c.l.b16 %v600
    %v640 = vunpack.c.l.b16 %v601
    %v641 = vunpack.c.l.b16 %v602
    %v642 = vunpack.c.l.b16 %v603
    %v643 = vunpack.c.l.b16 %v604
    %v644 = vunpack.c.l.b16 %v605
    %v645 = vunpack.c.l.b16 %v606
    %v646 = vunpack.c.l.b16 %v607
    %v647 = vunpack.c.l.b16 %v608
    %v648 = vunpack.c.l.b16 %v609
    %v649 = vunpack.c.l.b16 %v610
    %v650 = vunpack.c.l.b16 %v611
    %v651 = vunpack.c.l.b16 %v612
    %v652 = vunpack.c.l.b16 %v613
    %v653 = vpack.c.b16 %v638, %v637
    %v654 = vpack.c.b16 %v640, %v639
    %v655 = vpack.c.b16 %v642, %v641
    %v656 = vpack.c.b16 %v644, %v643
    %v657 = vpack.c.b16 %v646, %v645
    %v658 = vpack.c.b16 %v648, %v647
    %v659 = vpack.c.b16 %v650, %v649
    %v660 = vpack.c.b16 %v652, %v651
    %669 = vmatprep.subr.bf16.mxu0 0
    %670 = vmatpush1.bf16.msra.mxu0 %v653
    %671 = vmatprep.subr.bf16.mxu0 0
    %672 = vmatpush1.bf16.msra.mxu0 %v654
    %673 = vmatprep.subr.bf16.mxu0 0
    %674 = vmatpush1.bf16.msra.mxu0 %v655
    %675 = vmatprep.subr.bf16.mxu0 0
    %676 = vmatpush1.bf16.msra.mxu0 %v656
    %677 = vmatprep.subr.bf16.mxu0 0
    %678 = vmatpush1.bf16.msra.mxu0 %v657
    %679 = vmatprep.subr.bf16.mxu0 0
    %680 = vmatpush1.bf16.msra.mxu0 %v658
    %681 = vmatprep.subr.bf16.mxu0 0
    %682 = vmatpush1.bf16.msra.mxu0 %v659
    %683 = vmatprep.subr.bf16.mxu0 0
    %684 = vmatpush1.bf16.msra.mxu0 %v660
    %685 = vmatprep.subr.bf16.mxu0 0
    %686 = vmatpush1.bf16.msra.mxu0 0
    %687 = vmatprep.subr.bf16.mxu0 0
    %688 = vmatpush1.bf16.msra.mxu0 0
    %689 = vmatprep.subr.bf16.mxu0 0
    %690 = vmatpush1.bf16.msra.mxu0 0
    %691 = vmatprep.subr.bf16.mxu0 0
    %692 = vmatpush1.bf16.msra.mxu0 0
    %693 = vmatprep.subr.bf16.mxu0 0
    %694 = vmatpush1.bf16.msra.mxu0 0
    %695 = vmatprep.subr.bf16.mxu0 0
    %696 = vmatpush1.bf16.msra.mxu0 0
    %697 = vmatprep.subr.bf16.mxu0 0
    %698 = vmatpush1.bf16.msra.mxu0 0
    %699 = vmatprep.subr.bf16.mxu0 0
    %700 = vmatpush1.bf16.msra.mxu0 0
    %701 = vmatprep.mubr.bf16.mxu0 0
    %702 = vmatmul.mubr.bf16.gmra.mrb[0].mxu0 %v597
    %v703 = vpop.f32.mrb[0].mxu0
    %v704 = vadd.f32 %v619, %v703
    %v705 = vpop.f32.mrb[0].mxu0
    %v706 = vpop.f32.mrb[0].mxu0
    %v707 = vadd.f32 %v619, %v706
    %v708 = vpop.f32.mrb[0].mxu0
    %709 = vdwg.mxu0
    %v710 = vmul.f32 %v704, 0.01
    %v711 = vmul.f32 %v707, 0.01
    %v712 = vmax.f32 %v704, %v710
    %v713 = vmax.f32 %v707, %v711
    %v714 = vpack.c.bf16 %v713, %v712
    %v715 = vld [vmem:[%s5] sm:$0xf]
    %v716 = vld [vmem:[%s5 + $0x4] sm:$0xf]
    %v717 = vld [vmem:[%s5 + $0x8] sm:$0xf]
    %v718 = vld [vmem:[%s5 + $0xc] sm:$0xf]
    %v719 = vld [vmem:[%s5 + $0x10] sm:$0xf]
    %v720 = vld [vmem:[%s5 + $0x14] sm:$0xf]
    %v721 = vld [vmem:[%s5 + $0x18] sm:$0xf]
    %v722 = vld [vmem:[%s5 + $0x1c] sm:$0xf]
    %v723 = vld [vmem:[%s5 + $0x20] sm:$0xf]
    %v724 = vld [vmem:[%s5 + $0x24] sm:$0xf]
    %v725 = vld [vmem:[%s5 + $0x28] sm:$0xf]
    %v726 = vld [vmem:[%s5 + $0x2c] sm:$0xf]
    %v727 = vld [vmem:[%s5 + $0x30] sm:$0xf]
    %v728 = vld [vmem:[%s5 + $0x34] sm:$0xf]
    %v729 = vld [vmem:[%s5 + $0x38] sm:$0xf]
    %v730 = vld [vmem:[%s5 + $0x3c] sm:$0xf]
    %v731 = vld [vmem:[%s6] sm:$0x1]
    %v733 = vlaneseq
    %v734 = vshrl.u32 %v733, 7
    %v735 = vsub.s32 0, %v734
    %v736 = vrot.slane %v731, %v735
    %v754 = vunpack.c.l.b16 %v715
    %v755 = vunpack.c.l.b16 %v716
    %v756 = vunpack.c.l.b16 %v717
    %v757 = vunpack.c.l.b16 %v718
    %v758 = vunpack.c.l.b16 %v719
    %v759 = vunpack.c.l.b16 %v720
    %v760 = vunpack.c.l.b16 %v721
    %v761 = vunpack.c.l.b16 %v722
    %v762 = vunpack.c.l.b16 %v723
    %v763 = vunpack.c.l.b16 %v724
    %v764 = vunpack.c.l.b16 %v725
    %v765 = vunpack.c.l.b16 %v726
    %v766 = vunpack.c.l.b16 %v727
    %v767 = vunpack.c.l.b16 %v728
    %v768 = vunpack.c.l.b16 %v729
    %v769 = vunpack.c.l.b16 %v730
    %v770 = vpack.c.b16 %v755, %v754
    %v771 = vpack.c.b16 %v757, %v756
    %v772 = vpack.c.b16 %v759, %v758
    %v773 = vpack.c.b16 %v761, %v760
    %v774 = vpack.c.b16 %v763, %v762
    %v775 = vpack.c.b16 %v765, %v764
    %v776 = vpack.c.b16 %v767, %v766
    %v777 = vpack.c.b16 %v769, %v768
    %786 = vmatprep.subr.bf16.mxu0 0
    %787 = vmatpush1.bf16.msra.mxu0 %v770
    %788 = vmatprep.subr.bf16.mxu0 0
    %789 = vmatpush1.bf16.msra.mxu0 %v771
    %790 = vmatprep.subr.bf16.mxu0 0
    %791 = vmatpush1.bf16.msra.mxu0 %v772
    %792 = vmatprep.subr.bf16.mxu0 0
    %793 = vmatpush1.bf16.msra.mxu0 %v773
    %794 = vmatprep.subr.bf16.mxu0 0
    %795 = vmatpush1.bf16.msra.mxu0 %v774
    %796 = vmatprep.subr.bf16.mxu0 0
    %797 = vmatpush1.bf16.msra.mxu0 %v775
    %798 = vmatprep.subr.bf16.mxu0 0
    %799 = vmatpush1.bf16.msra.mxu0 %v776
    %800 = vmatprep.subr.bf16.mxu0 0
    %801 = vmatpush1.bf16.msra.mxu0 %v777
    %802 = vmatprep.subr.bf16.mxu0 0
    %803 = vmatpush1.bf16.msra.mxu0 0
    %804 = vmatprep.subr.bf16.mxu0 0
    %805 = vmatpush1.bf16.msra.mxu0 0
    %806 = vmatprep.subr.bf16.mxu0 0
    %807 = vmatpush1.bf16.msra.mxu0 0
    %808 = vmatprep.subr.bf16.mxu0 0
    %809 = vmatpush1.bf16.msra.mxu0 0
    %810 = vmatprep.subr.bf16.mxu0 0
    %811 = vmatpush1.bf16.msra.mxu0 0
    %812 = vmatprep.subr.bf16.mxu0 0
    %813 = vmatpush1.bf16.msra.mxu0 0
    %814 = vmatprep.subr.bf16.mxu0 0
    %815 = vmatpush1.bf16.msra.mxu0 0
    %816 = vmatprep.subr.bf16.mxu0 0
    %817 = vmatpush1.bf16.msra.mxu0 0
    %818 = vmatprep.mubr.bf16.mxu0 0
    %819 = vmatmul.mubr.bf16.gmra.mrb[0].mxu0 %v714
    %v820 = vpop.f32.mrb[0].mxu0
    %v821 = vadd.f32 %v736, %v820
    %v822 = vpop.f32.mrb[0].mxu0
    %v823 = vpop.f32.mrb[0].mxu0
    %v824 = vadd.f32 %v736, %v823
    %v825 = vpop.f32.mrb[0].mxu0
    %826 = vdwg.mxu0
    %v827 = vmul.f32 %v821, 0.01
    %v828 = vmul.f32 %v824, 0.01
    %v829 = vmax.f32 %v821, %v827
    %v830 = vmax.f32 %v824, %v828
    %v831 = vpack.c.bf16 %v830, %v829
    %v832 = vld [vmem:[%s7] sm:$0xf]
    %v833 = vld [vmem:[%s7 + $0x4] sm:$0xf]
    %v834 = vld [vmem:[%s7 + $0x8] sm:$0xf]
    %v835 = vld [vmem:[%s7 + $0xc] sm:$0xf]
    %v836 = vld [vmem:[%s7 + $0x10] sm:$0xf]
    %v837 = vld [vmem:[%s7 + $0x14] sm:$0xf]
    %v838 = vld [vmem:[%s7 + $0x18] sm:$0xf]
    %v839 = vld [vmem:[%s7 + $0x1c] sm:$0xf]
    %v840 = vld [vmem:[%s7 + $0x20] sm:$0xf]
    %v841 = vld [vmem:[%s7 + $0x24] sm:$0xf]
    %v842 = vld [vmem:[%s7 + $0x28] sm:$0xf]
    %v843 = vld [vmem:[%s7 + $0x2c] sm:$0xf]
    %v844 = vld [vmem:[%s7 + $0x30] sm:$0xf]
    %v845 = vld [vmem:[%s7 + $0x34] sm:$0xf]
    %v846 = vld [vmem:[%s7 + $0x38] sm:$0xf]
    %v847 = vld [vmem:[%s7 + $0x3c] sm:$0xf]
    %v848 = vld [vmem:[%s8] sm:$0x1]
    %v850 = vlaneseq
    %v851 = vshrl.u32 %v850, 7
    %v852 = vsub.s32 0, %v851
    %v853 = vrot.slane %v848, %v852
    %v871 = vunpack.c.l.b16 %v832
    %v872 = vunpack.c.l.b16 %v833
    %v873 = vunpack.c.l.b16 %v834
    %v874 = vunpack.c.l.b16 %v835
    %v875 = vunpack.c.l.b16 %v836
    %v876 = vunpack.c.l.b16 %v837
    %v877 = vunpack.c.l.b16 %v838
    %v878 = vunpack.c.l.b16 %v839
    %v879 = vunpack.c.l.b16 %v840
    %v880 = vunpack.c.l.b16 %v841
    %v881 = vunpack.c.l.b16 %v842
    %v882 = vunpack.c.l.b16 %v843
    %v883 = vunpack.c.l.b16 %v844
    %v884 = vunpack.c.l.b16 %v845
    %v885 = vunpack.c.l.b16 %v846
    %v886 = vunpack.c.l.b16 %v847
    %v887 = vpack.c.b16 %v872, %v871
    %v888 = vpack.c.b16 %v874, %v873
    %v889 = vpack.c.b16 %v876, %v875
    %v890 = vpack.c.b16 %v878, %v877
    %v891 = vpack.c.b16 %v880, %v879
    %v892 = vpack.c.b16 %v882, %v881
    %v893 = vpack.c.b16 %v884, %v883
    %v894 = vpack.c.b16 %v886, %v885
    %903 = vmatprep.subr.bf16.mxu0 0
    %904 = vmatpush1.bf16.msra.mxu0 %v887
    %905 = vmatprep.subr.bf16.mxu0 0
    %906 = vmatpush1.bf16.msra.mxu0 %v888
    %907 = vmatprep.subr.bf16.mxu0 0
    %908 = vmatpush1.bf16.msra.mxu0 %v889
    %909 = vmatprep.subr.bf16.mxu0 0
    %910 = vmatpush1.bf16.msra.mxu0 %v890
    %911 = vmatprep.subr.bf16.mxu0 0
    %912 = vmatpush1.bf16.msra.mxu0 %v891
    %913 = vmatprep.subr.bf16.mxu0 0
    %914 = vmatpush1.bf16.msra.mxu0 %v892
    %915 = vmatprep.subr.bf16.mxu0 0
    %916 = vmatpush1.bf16.msra.mxu0 %v893
    %917 = vmatprep.subr.bf16.mxu0 0
    %918 = vmatpush1.bf16.msra.mxu0 %v894
    %919 = vmatprep.subr.bf16.mxu0 0
    %920 = vmatpush1.bf16.msra.mxu0 0
    %921 = vmatprep.subr.bf16.mxu0 0
    %922 = vmatpush1.bf16.msra.mxu0 0
    %923 = vmatprep.subr.bf16.mxu0 0
    %924 = vmatpush1.bf16.msra.mxu0 0
    %925 = vmatprep.subr.bf16.mxu0 0
    %926 = vmatpush1.bf16.msra.mxu0 0
    %927 = vmatprep.subr.bf16.mxu0 0
    %928 = vmatpush1.bf16.msra.mxu0 0
    %929 = vmatprep.subr.bf16.mxu0 0
    %930 = vmatpush1.bf16.msra.mxu0 0
    %931 = vmatprep.subr.bf16.mxu0 0
    %932 = vmatpush1.bf16.msra.mxu0 0
    %933 = vmatprep.subr.bf16.mxu0 0
    %934 = vmatpush1.bf16.msra.mxu0 0
    %935 = vmatprep.mubr.bf16.mxu0 0
    %936 = vmatmul.mubr.bf16.gmra.mrb[0].mxu0 %v831
    %v937 = vpop.f32.mrb[0].mxu0
    %v938 = vadd.f32 %v853, %v937
    %v939 = vpop.f32.mrb[0].mxu0
    %v940 = vpop.f32.mrb[0].mxu0
    %v941 = vadd.f32 %v853, %v940
    %v942 = vpop.f32.mrb[0].mxu0
    %943 = vdwg.mxu0
    %944 = vst [vmem:[#allocation2] sm:$0xff] %v938
    %945 = vst [vmem:[#allocation2 + $0x8] sm:$0xff] %v941
    // Predicated region
    $region38: #{dqn_forward.5} parent=1 // pred_check
      _
    $region39: #{dqn_forward.5} parent=1 // pred_check_branch
      %947 = sbr.rel (0) target = $region41
    $region40: #{dqn_forward.5} parent=1 // pred_region
      %s949 = ssub.s32 256, 32
      %950 = vsyncadd [#allocation3], %s949
      %s951 = sshll.u32 [#allocation2], 4
      %s952 = int_to_ptr.vmem [resolvable:$true] %s951
      %957 = dma.vmem_to_hbm [thread:$0]  %s952, 32, %s9, [#allocation3], 32, 32, 2
    $region41: #{dqn_forward.5} parent=1 // pred_fallthru
      _
    // Predicated region
    $region42: #{dqn_forward.5} parent=1 // pred_check
      _
    $region43: #{dqn_forward.5} parent=1 // pred_check_branch
      %959 = sbr.rel (0) target = $region45
    $region44: #{dqn_forward.5} parent=1 // pred_region
      %960 = dma.done [#allocation3], 256
    $region45: #{dqn_forward.5} parent=1 // pred_fallthru
      _
    %961 = vsyncpa [#allocation3], 1

</llo_original>
